<compile_context>
chip_gen: v6e
topology: v6e:2x2x1
jax: 0.10.0
libtpu: 0.0.40
codegen_flags: <defaults>
</compile_context>

<pallas_src>
import functools

import numpy as np
import jax
import jax.numpy as jnp
from jax import lax
from jax.experimental import pallas as pl
from jax.experimental.pallas import tpu as pltpu

D = 15
EPS = 1e-5

# conv geometry implied by the module
C1_IN, C1_OUT, K = 16, 8, 3          # ConvTranspose2d(16, 8, 3, s=2, p=1, op=1)
H_IN, W_IN = 3, 3                    # unflatten -> (16, 3, 3)
H_MID, W_MID = 6, 6                  # after first conv-transpose
C2_IN, C2_OUT = 8, 1                 # ConvTranspose2d(8, 1, 3, s=2, p=1, op=1)
H_OUT, W_OUT = 12, 12                # after second conv-transpose

F_IN1 = C1_IN * H_IN * W_IN          # 144
F_OUT1 = C1_OUT * H_MID * W_MID      # 288
F_OUT2 = C2_OUT * H_OUT * W_OUT      # 144
TB_DEFAULT = 1024                    # ~8 MiB VMEM at TB=1024 (double-buffered x/out
                                     # + intermediates) -> fits default scoped VMEM
                                     # on v5e/v6e/v7x; raise (with vmem_limit_bytes)
                                     # for very large batches.


def _round_up(n, m):
    return ((n + m - 1) // m) * m


def convtranspose_as_matrix(weight, cin, cout, hin, win, hout, wout, k, stride, pad):
    """Build M (cin*hin*win, cout*hout*wout) such that flat_out = flat_in @ M.

    weight: numpy array in PyTorch ConvTranspose2d layout (cin, cout, k, k).
    """
    M = np.zeros((cin * hin * win, cout * hout * wout), dtype=np.float32)
    for ci in range(cin):
        for ih in range(hin):
            for iw in range(win):
                row = ci * hin * win + ih * win + iw
                for co in range(cout):
                    for kh in range(k):
                        for kw in range(k):
                            oh = ih * stride - pad + kh
                            ow = iw * stride - pad + kw
                            if 0 <= oh < hout and 0 <= ow < wout:
                                col = co * hout * wout + oh * wout + ow
                                M[row, col] += weight[ci, co, kh, kw]
    return M


def _resident_spec(shape):
    """Full-array BlockSpec whose block index never changes -> VMEM-resident."""
    zeros = (0,) * len(shape)
    return pl.BlockSpec(shape, lambda i: zeros)


def _trunk(x, w1, b1, w2, b2, m1):
    """Linear(15,128)+ReLU, Linear(128,144)+ReLU, ConvT1-as-matmul.

    MXU operands (x, w1, w2, m1 and the activations feeding each dot) are bf16;
    accumulation, bias adds and ReLU stay f32 (preferred_element_type=f32).
    The ConvT1 per-channel bias is intentionally omitted: it is exactly
    cancelled by the training-mode BatchNorm mean subtraction that follows.
    """
    h = jnp.maximum(jnp.dot(x, w1, preferred_element_type=jnp.float32) + b1, 0.0)
    h = jnp.maximum(jnp.dot(h.astype(w2.dtype), w2,
                            preferred_element_type=jnp.float32) + b2, 0.0)
    return jnp.dot(h.astype(m1.dtype), m1, preferred_element_type=jnp.float32)


def _stats_kernel(x_ref, w1_ref, b1_ref, w2_ref, b2_ref, m1_ref, sel_ref,
                  stats_ref, *, batch, tile_b):
    y1 = _trunk(x_ref[...], w1_ref[...], b1_ref[...], w2_ref[...], b2_ref[...],
                m1_ref[...])                                       # (TB, 288) f32
    # Batch-padding mask + axis-0 sums folded into MXU matmuls: a (1, TB) 0/1
    # validity row replaces the old per-element jnp.where + two tree reductions.
    col = lax.broadcasted_iota(jnp.int32, (1, tile_b), 1) + pl.program_id(0) * tile_b
    mask_row = (col < batch).astype(jnp.float32)                   # (1, TB)
    ssum = jnp.dot(mask_row, y1, preferred_element_type=jnp.float32)        # (1,288)
    sqsum = jnp.dot(mask_row, y1 * y1, preferred_element_type=jnp.float32)  # (1,288)
    s = jnp.concatenate([ssum, sqsum], axis=0)                     # (2, 288) f32
    # Tiny per-channel selector matmul: (2,288)@(288,8).
    stats_ref[0] = jnp.dot(s, sel_ref[...], preferred_element_type=jnp.float32)


def _decode_kernel(x_ref, w1_ref, b1_ref, w2_ref, b2_ref, m1s_ref, shift_ref,
                   m2_ref, bc2_ref, out_ref):
    # m1s already has the per-channel BN scale folded into its columns, so the
    # BN here is just the shift add.
    y1s = _trunk(x_ref[...], w1_ref[...], b1_ref[...], w2_ref[...], b2_ref[...],
                 m1s_ref[...])                                     # (TB, 288) f32
    h2 = jnp.maximum(y1s + shift_ref[...], 0.0)                    # BN shift + ReLU
    m2 = m2_ref[...]
    y2 = jnp.dot(h2.astype(m2.dtype), m2,
                 preferred_element_type=jnp.float32) + bc2_ref[...]
    # sigmoid(x) == 0.5*tanh(0.5*x) + 0.5 : one EUP pass instead of exp+recip.
    out_ref[...] = 0.5 * jnp.tanh(0.5 * y2) + 0.5                  # (TB, 144)


def decoder2l_forward(x, params, tile_b=TB_DEFAULT):
    """x: (B, 15) float32.  Returns (B, 1, 12, 12) float32 (NCHW)."""
    B = x.shape[0]
    B8 = _round_up(max(B, 1), 8)
    # Keep >= 2 grid steps whenever the batch allows so the v7x megacore
    # (dimension_semantics=("parallel",)) can shard the grid across its 2 TCs.
    tb_cap = max(8, _round_up(pl.cdiv(B8, 2), 8))
    TB = min(tile_b, B8, tb_cap)
    B_pad = _round_up(B, TB)
    ntiles = B_pad // TB
    xp = jnp.pad(x, ((0, B_pad - B), (0, 0))) if B_pad != B else x
    xp = xp.astype(jnp.bfloat16)

    # MXU operands in bf16; biases / BN / selector stay f32.
    w1 = params["w1"].astype(jnp.bfloat16)
    w2 = params["w2"].astype(jnp.bfloat16)
    m1 = params["m1"].astype(jnp.bfloat16)
    m2 = params["m2"].astype(jnp.bfloat16)
    b1, b2, sel, bc2 = params["b1"], params["b2"], params["sel"], params["bc2"]

    x_spec = pl.BlockSpec((TB, D), lambda i: (i, 0))
    cp_kwargs = dict(dimension_semantics=("parallel",))
    if TB > 1536:   # bigger tiles exceed the default scoped-VMEM budget
        cp_kwargs["vmem_limit_bytes"] = 48 * 1024 * 1024
    par = pltpu.CompilerParams(**cp_kwargs)

    def _nbytes(*arrs):
        return int(sum(int(a.size) * a.dtype.itemsize for a in arrs))

    trunk_flops = 2 * (D * 128 + 128 * F_IN1 + F_IN1 * F_OUT1)   # per row

    # ---- stage 1: per-tile per-channel sum / sqsum of the pre-BN activations
    stats = pl.pallas_call(
        functools.partial(_stats_kernel, batch=B, tile_b=TB),
        out_shape=jax.ShapeDtypeStruct((ntiles, 2, C1_OUT), jnp.float32),
        grid=(ntiles,),
        in_specs=[x_spec, _resident_spec(w1.shape), _resident_spec(b1.shape),
                  _resident_spec(w2.shape), _resident_spec(b2.shape),
                  _resident_spec(m1.shape), _resident_spec(sel.shape)],
        out_specs=pl.BlockSpec((1, 2, C1_OUT), lambda i: (i, 0, 0)),
        compiler_params=par,
        cost_estimate=pl.CostEstimate(
            flops=int(B_pad * (trunk_flops + 5 * F_OUT1)
                      + ntiles * 2 * 2 * F_OUT1 * C1_OUT),
            transcendentals=0,
            bytes_accessed=_nbytes(xp, w1, b1, w2, b2, m1, sel)
                           + ntiles * 2 * C1_OUT * 4),
    )(xp, w1, b1, w2, b2, m1, sel)

    # ---- BatchNorm finalize (8 channels of scalar math) in JAX glue; fold
    #      gamma/rsqrt(var) into the ConvT1 matrix columns for stage 2.
    tot = jnp.sum(stats, axis=0)                       # (2, 8)
    count = jnp.float32(B * H_MID * W_MID)
    mean = tot[0] / count
    var = tot[1] / count - mean * mean                 # biased (training) variance
    scale = params["gamma"].reshape(-1) * lax.rsqrt(var + EPS)
    shift = params["beta"].reshape(-1) - mean * scale
    scale_b = jnp.repeat(scale, H_MID * W_MID).reshape(1, F_OUT1)
    shift_b = jnp.repeat(shift, H_MID * W_MID).reshape(1, F_OUT1)
    m1s = (params["m1"] * scale_b).astype(jnp.bfloat16)   # BN scale folded into m1

    # ---- stage 2: recompute trunk (scaled), BN shift + ReLU, ConvT2, sigmoid
    out = pl.pallas_call(
        _decode_kernel,
        out_shape=jax.ShapeDtypeStruct((B_pad, F_OUT2), jnp.float32),
        grid=(ntiles,),
        in_specs=[x_spec, _resident_spec(w1.shape), _resident_spec(b1.shape),
                  _resident_spec(w2.shape), _resident_spec(b2.shape),
                  _resident_spec(m1s.shape), _resident_spec(shift_b.shape),
                  _resident_spec(m2.shape), _resident_spec(bc2.shape)],
        out_specs=pl.BlockSpec((TB, F_OUT2), lambda i: (i, 0)),
        compiler_params=par,
        cost_estimate=pl.CostEstimate(
            flops=int(B_pad * (trunk_flops + 2 * F_OUT1 * F_OUT2 + 2 * F_OUT1)),
            transcendentals=int(B_pad * F_OUT2),
            bytes_accessed=_nbytes(xp, w1, b1, w2, b2, m1s, shift_b, m2, bc2)
                           + B_pad * F_OUT2 * 4),
    )(xp, w1, b1, w2, b2, m1s, shift_b, m2, bc2)

    out = out if B_pad == B else out[:B]
    return out.reshape(B, C2_OUT, H_OUT, W_OUT)


def make_params(seed=42):
    keys = jax.random.split(jax.random.PRNGKey(seed), 8)

    def unif(key, shape, fan_in):
        bound = 1.0 / np.sqrt(fan_in)
        return jax.random.uniform(key, shape, jnp.float32, -bound, bound)

    # Linear(15,128), Linear(128,144) — stored as (in, out) for x @ W
    w1 = unif(keys[0], (D, 128), D)
    b1 = unif(keys[1], (1, 128), D)
    w2 = unif(keys[2], (128, F_IN1), 128)
    b2 = unif(keys[3], (1, F_IN1), 128)

    # ConvTranspose2d weights in PyTorch layout (cin, cout, k, k)
    ct1_w = np.asarray(unif(keys[4], (C1_IN, C1_OUT, K, K), C1_OUT * K * K))
    ct1_b = unif(keys[5], (C1_OUT,), C1_OUT * K * K)
    ct2_w = np.asarray(unif(keys[6], (C2_IN, C2_OUT, K, K), C2_OUT * K * K))
    ct2_b = unif(keys[7], (C2_OUT,), C2_OUT * K * K)

    m1 = jnp.asarray(convtranspose_as_matrix(
        ct1_w, C1_IN, C1_OUT, H_IN, W_IN, H_MID, W_MID, K, 2, 1))
    m2 = jnp.asarray(convtranspose_as_matrix(
        ct2_w, C2_IN, C2_OUT, H_MID, W_MID, H_OUT, W_OUT, K, 2, 1))
    bc1 = jnp.repeat(ct1_b, H_MID * W_MID).reshape(1, F_OUT1)   # reference only
    bc2 = jnp.repeat(ct2_b, H_OUT * W_OUT).reshape(1, F_OUT2)

    # BatchNorm2d(8) affine params (PyTorch defaults)
    gamma = jnp.ones((1, C1_OUT), jnp.float32)
    beta = jnp.zeros((1, C1_OUT), jnp.float32)

    # channel one-hot selector: sel[c*36 + s, c] = 1
    sel = np.zeros((F_OUT1, C1_OUT), dtype=np.float32)
    for c in range(C1_OUT):
        sel[c * H_MID * W_MID:(c + 1) * H_MID * W_MID, c] = 1.0

    return dict(w1=w1, b1=b1, w2=w2, b2=b2, m1=m1, bc1=bc1, m2=m2, bc2=bc2,
                gamma=gamma, beta=beta, sel=jnp.asarray(sel))


def reference_forward(x, p):
    """Pure-JAX f32 reference of the PyTorch module (training-mode BN, with bc1)."""
    h = jnp.maximum(x @ p["w1"] + p["b1"], 0.0)
    h = jnp.maximum(h @ p["w2"] + p["b2"], 0.0)
    y1 = h @ p["m1"] + p["bc1"]
    y1r = y1.reshape(-1, C1_OUT, H_MID * W_MID)
    mean = y1r.mean(axis=(0, 2), keepdims=True)
    var = ((y1r - mean) ** 2).mean(axis=(0, 2), keepdims=True)
    g = p["gamma"].reshape(1, C1_OUT, 1)
    b = p["beta"].reshape(1, C1_OUT, 1)
    yn = (y1r - mean) * lax.rsqrt(var + EPS) * g + b
    h2 = jnp.maximum(yn, 0.0).reshape(x.shape[0], F_OUT1)
    y2 = h2 @ p["m2"] + p["bc2"]
    return jax.nn.sigmoid(y2).reshape(x.shape[0], C2_OUT, H_OUT, W_OUT)


if __name__ == "__main__":
    B = 80                    # not a multiple of the tile: exercises padding + masking
    x = jax.random.normal(jax.random.PRNGKey(0), (B, D), dtype=jnp.float32)
    params = make_params(seed=42)

    # small tile so the test runs several grid steps; production default is 1024
    out = decoder2l_forward(x, params, tile_b=32)
    out = jax.block_until_ready(out)

    ref = reference_forward(x, params)
    assert out.shape == (B, 1, 12, 12)
    # Kernel matmuls run in bf16 (f32 accumulation), so tolerance against the
    # pure-f32 reference is bf16-level; typical |err| is ~1e-3 on the sigmoid
    # outputs (values in (0,1)).
    assert jnp.allclose(out, ref, atol=5e-2), "mismatch vs f32 reference"
    print("KERNEL_OK")
</pallas_src>

<mosaic_0001>
module attributes {stable_mosaic.version = 11 : i64} {
  func.func @_stats_kernel(%arg0: i32, %arg1: memref<32x15xbf16, #tpu.memory_space<vmem>>, %arg2: memref<15x128xbf16, #tpu.memory_space<vmem>>, %arg3: memref<1x128xf32, #tpu.memory_space<vmem>>, %arg4: memref<128x144xbf16, #tpu.memory_space<vmem>>, %arg5: memref<1x144xf32, #tpu.memory_space<vmem>>, %arg6: memref<144x288xbf16, #tpu.memory_space<vmem>>, %arg7: memref<288x8xf32, #tpu.memory_space<vmem>>, %arg8: memref<1x2x8xf32, #tpu.memory_space<vmem>>) attributes {dimension_semantics = [#tpu.dimension_semantics<parallel>], iteration_bounds = array<i64: 3>, scalar_prefetch = 0 : i64, scratch_operands = 0 : i64, tpu.core_type = #tpu.core_type<tc>, window_params = [{transform_indices = @transform_0, window_bounds = array<i64: 32, 15>}, {pipeline_mode = #tpu.pipeline_mode<synchronous>, transform_indices = @transform_1, window_bounds = array<i64: 15, 128>}, {pipeline_mode = #tpu.pipeline_mode<synchronous>, transform_indices = @transform_2, window_bounds = array<i64: 1, 128>}, {pipeline_mode = #tpu.pipeline_mode<synchronous>, transform_indices = @transform_3, window_bounds = array<i64: 128, 144>}, {pipeline_mode = #tpu.pipeline_mode<synchronous>, transform_indices = @transform_4, window_bounds = array<i64: 1, 144>}, {pipeline_mode = #tpu.pipeline_mode<synchronous>, transform_indices = @transform_5, window_bounds = array<i64: 144, 288>}, {pipeline_mode = #tpu.pipeline_mode<synchronous>, transform_indices = @transform_6, window_bounds = array<i64: 288, 8>}, {transform_indices = @transform_7, window_bounds = array<i64: 1, 2, 8>}]} {
    %c0 = arith.constant 0 : index
    %c0_0 = arith.constant 0 : index
    %0 = vector.load %arg1[%c0, %c0_0] : memref<32x15xbf16, #tpu.memory_space<vmem>>, vector<32x15xbf16>
    %c0_1 = arith.constant 0 : index
    %c0_2 = arith.constant 0 : index
    %1 = vector.load %arg2[%c0_1, %c0_2] : memref<15x128xbf16, #tpu.memory_space<vmem>>, vector<15x128xbf16>
    %c0_3 = arith.constant 0 : index
    %c0_4 = arith.constant 0 : index
    %2 = vector.load %arg3[%c0_3, %c0_4] : memref<1x128xf32, #tpu.memory_space<vmem>>, vector<1x128xf32>
    %c0_5 = arith.constant 0 : index
    %c0_6 = arith.constant 0 : index
    %3 = vector.load %arg4[%c0_5, %c0_6] : memref<128x144xbf16, #tpu.memory_space<vmem>>, vector<128x144xbf16>
    %c0_7 = arith.constant 0 : index
    %c0_8 = arith.constant 0 : index
    %4 = vector.load %arg5[%c0_7, %c0_8] : memref<1x144xf32, #tpu.memory_space<vmem>>, vector<1x144xf32>
    %c0_9 = arith.constant 0 : index
    %c0_10 = arith.constant 0 : index
    %5 = vector.load %arg6[%c0_9, %c0_10] : memref<144x288xbf16, #tpu.memory_space<vmem>>, vector<144x288xbf16>
    %cst = arith.constant dense<0.000000e+00> : vector<32x128xf32>
    %6 = tpu.matmul %0, %1, %cst {dimension_numbers = #tpu.dot_dimension_numbers<[1], [0], [0], [1], [0, 0, 1, 1], [], []>} : vector<32x15xbf16>, vector<15x128xbf16>, vector<32x128xf32> -> vector<32x128xf32>
    %7 = vector.broadcast %2 : vector<1x128xf32> to vector<32x128xf32>
    %8 = arith.addf %6, %7 : vector<32x128xf32>
    %cst_11 = arith.constant 0.000000e+00 : f32
    %9 = vector.broadcast %cst_11 : f32 to vector<32x128xf32>
    %10 = arith.maximumf %8, %9 : vector<32x128xf32>
    %11 = arith.truncf %10 : vector<32x128xf32> to vector<32x128xbf16>
    %cst_12 = arith.constant dense<0.000000e+00> : vector<32x144xf32>
    %12 = tpu.matmul %11, %3, %cst_12 {dimension_numbers = #tpu.dot_dimension_numbers<[1], [0], [0], [1], [0, 0, 1, 1], [], []>} : vector<32x128xbf16>, vector<128x144xbf16>, vector<32x144xf32> -> vector<32x144xf32>
    %13 = vector.broadcast %4 : vector<1x144xf32> to vector<32x144xf32>
    %14 = arith.addf %12, %13 : vector<32x144xf32>
    %cst_13 = arith.constant 0.000000e+00 : f32
    %15 = vector.broadcast %cst_13 : f32 to vector<32x144xf32>
    %16 = arith.maximumf %14, %15 : vector<32x144xf32>
    %17 = arith.truncf %16 : vector<32x144xf32> to vector<32x144xbf16>
    %cst_14 = arith.constant dense<0.000000e+00> : vector<32x288xf32>
    %18 = tpu.matmul %17, %5, %cst_14 {dimension_numbers = #tpu.dot_dimension_numbers<[1], [0], [0], [1], [0, 0, 1, 1], [], []>} : vector<32x144xbf16>, vector<144x288xbf16>, vector<32x288xf32> -> vector<32x288xf32>
    %19 = tpu.iota {dimensions = array<i32: 1>} : vector<1x32xi32>
    %c32_i32 = arith.constant 32 : i32
    %20 = arith.muli %arg0, %c32_i32 : i32
    %21 = vector.broadcast %20 : i32 to vector<1x32xi32>
    %22 = arith.addi %19, %21 : vector<1x32xi32>
    %c80_i32 = arith.constant 80 : i32
    %23 = vector.broadcast %c80_i32 : i32 to vector<1x32xi32>
    %24 = arith.cmpi slt, %22, %23 : vector<1x32xi32>
    %25 = arith.extui %24 : vector<1x32xi1> to vector<1x32xi32>
    %26 = arith.sitofp %25 : vector<1x32xi32> to vector<1x32xf32>
    %cst_15 = arith.constant dense<0.000000e+00> : vector<1x288xf32>
    %27 = tpu.matmul %26, %18, %cst_15 {dimension_numbers = #tpu.dot_dimension_numbers<[1], [0], [0], [1], [0, 0, 1, 1], [], []>} : vector<1x32xf32>, vector<32x288xf32>, vector<1x288xf32> -> vector<1x288xf32>
    %28 = arith.mulf %18, %18 : vector<32x288xf32>
    %cst_16 = arith.constant dense<0.000000e+00> : vector<1x288xf32>
    %29 = tpu.matmul %26, %28, %cst_16 {dimension_numbers = #tpu.dot_dimension_numbers<[1], [0], [0], [1], [0, 0, 1, 1], [], []>} : vector<1x32xf32>, vector<32x288xf32>, vector<1x288xf32> -> vector<1x288xf32>
    %30 = tpu.concatenate %27, %29 in 0 : vector<1x288xf32>, vector<1x288xf32> -> vector<2x288xf32>
    %c0_17 = arith.constant 0 : index
    %c0_18 = arith.constant 0 : index
    %31 = vector.load %arg7[%c0_17, %c0_18] : memref<288x8xf32, #tpu.memory_space<vmem>>, vector<288x8xf32>
    %cst_19 = arith.constant dense<0.000000e+00> : vector<2x8xf32>
    %32 = tpu.matmul %30, %31, %cst_19 {dimension_numbers = #tpu.dot_dimension_numbers<[1], [0], [0], [1], [0, 0, 1, 1], [], []>} : vector<2x288xf32>, vector<288x8xf32>, vector<2x8xf32> -> vector<2x8xf32>
    %c0_20 = arith.constant 0 : index
    %c0_21 = arith.constant 0 : index
    %c0_22 = arith.constant 0 : index
    %33 = vector.load %arg8[%c0_20, %c0_21, %c0_22] : memref<1x2x8xf32, #tpu.memory_space<vmem>>, vector<1x2x8xf32>
    %34 = vector.shape_cast %33 : vector<1x2x8xf32> to vector<2x8xf32>
    %35 = vector.shape_cast %32 : vector<2x8xf32> to vector<1x2x8xf32>
    tpu.vector_store %arg8[%c0_20, %c0_21, %c0_22], %35 {strides = array<i32>} : memref<1x2x8xf32, #tpu.memory_space<vmem>>, vector<1x2x8xf32>,
    return
  }
  func.func @transform_0(%arg0: i32) -> (i32, i32) {
    %c0_i32 = arith.constant 0 : i32
    %c0_i32_0 = arith.constant 0 : i32
    return %arg0, %c0_i32 : i32, i32
  }
  func.func @transform_1(%arg0: i32) -> (i32, i32) {
    %c0_i32 = arith.constant 0 : i32
    %c0_i32_0 = arith.constant 0 : i32
    %c0_i32_1 = arith.constant 0 : i32
    return %c0_i32, %c0_i32_0 : i32, i32
  }
  func.func @transform_2(%arg0: i32) -> (i32, i32) {
    %c0_i32 = arith.constant 0 : i32
    %c0_i32_0 = arith.constant 0 : i32
    %c0_i32_1 = arith.constant 0 : i32
    return %c0_i32, %c0_i32_0 : i32, i32
  }
  func.func @transform_3(%arg0: i32) -> (i32, i32) {
    %c0_i32 = arith.constant 0 : i32
    %c0_i32_0 = arith.constant 0 : i32
    %c0_i32_1 = arith.constant 0 : i32
    return %c0_i32, %c0_i32_0 : i32, i32
  }
  func.func @transform_4(%arg0: i32) -> (i32, i32) {
    %c0_i32 = arith.constant 0 : i32
    %c0_i32_0 = arith.constant 0 : i32
    %c0_i32_1 = arith.constant 0 : i32
    return %c0_i32, %c0_i32_0 : i32, i32
  }
  func.func @transform_5(%arg0: i32) -> (i32, i32) {
    %c0_i32 = arith.constant 0 : i32
    %c0_i32_0 = arith.constant 0 : i32
    %c0_i32_1 = arith.constant 0 : i32
    return %c0_i32, %c0_i32_0 : i32, i32
  }
  func.func @transform_6(%arg0: i32) -> (i32, i32) {
    %c0_i32 = arith.constant 0 : i32
    %c0_i32_0 = arith.constant 0 : i32
    %c0_i32_1 = arith.constant 0 : i32
    return %c0_i32, %c0_i32_0 : i32, i32
  }
  func.func @transform_7(%arg0: i32) -> (i32, i32, i32) {
    %c0_i32 = arith.constant 0 : i32
    %c0_i32_0 = arith.constant 0 : i32
    %c0_i32_1 = arith.constant 0 : i32
    return %arg0, %c0_i32, %c0_i32_0 : i32, i32, i32
  }
}

</mosaic_0001>

<llo_original>
// kernel: tpu_custom_call.1
$region0: #{tpu_custom_call.1}
  #allocation0 [shape = 'u32[]', space=smem, size = 0x4, offset = 0x4, fixed_abs, tag = 'smem constant byte address 0x4 - core index']
  #allocation1 [shape = 'u32[144,128]{1,0:T(1,128)}', space=vmem, size = 0x12000, scoped, tag = 'internal scratch']
  %s0 = inlined_call_operand.vmem [shape: bf16[96,15], index: 0, kind: input, shape index: {}]
  %s1 = inlined_call_operand.vmem [shape: bf16[15,128], index: 1, kind: input, shape index: {}]
  %s2 = inlined_call_operand.vmem [shape: f32[1,128], index: 2, kind: input, shape index: {}]
  %s3 = inlined_call_operand.vmem [shape: bf16[128,144], index: 3, kind: input, shape index: {}]
  %s4 = inlined_call_operand.vmem [shape: f32[1,144], index: 4, kind: input, shape index: {}]
  %s5 = inlined_call_operand.vmem [shape: bf16[144,288], index: 5, kind: input, shape index: {}]
  %s6 = inlined_call_operand.vmem [shape: f32[288,8], index: 6, kind: input, shape index: {}]
  %s7 = inlined_call_operand.hbm [shape: f32[3,2,8], index: 7, kind: output, shape index: {}]
  %s8 = sld [smem:[#allocation0]]
  $region61: #{tpu_custom_call.1} parent=0
    _
  %s10 = ssub.s32 1, %s8
  %s11 = scalar_select 0, %s10, %s8
  $region1: #{tpu_custom_call.1} parent=0
    #allocation2 [shape = 'u8[2048]{0}', space=vmem, size = 0x800, scoped, tag = 'output window, operand 0']
    #allocation3 [shape = 's32[2]{0}', space=sflag, size = 0x8, scoped, tag = 'scoped memory for tpu_custom_call.1']
    %12 = vsyncpa [#allocation3], 0
    %s13 = scalar_lea.sflag [#allocation3], 1
    %14 = vsyncpa %s13, 0
    loop: start=0, step=1, limit=5
    $region2: #{tpu_custom_call.1} parent=1 // loop_pre_header
      _
    $region3: #{tpu_custom_call.1} parent=1 // loop_header
      %s16 = sphi 0, %s20
      %p17 = scmp.ge.s32.totalorder %s16, 5
      %s26 = sphi 0, %s28
      %s29 = sphi 0, %s26
      %s30 = sphi 0, %s29
      %s46 = sphi 0, %s30
      %s50 = sphi 0, %s50
      %s52 = sphi 0, %s50
      %s53 = sphi 0, %s52
      %s67 = sphi 0, %s53
      %s71 = sphi 0, %s71
      %s73 = sphi 0, %s71
      %s74 = sphi 0, %s73
      %s88 = sphi 0, %s74
      %s92 = sphi 0, %s92
      %s94 = sphi 0, %s92
      %s95 = sphi 0, %s94
      %s109 = sphi 0, %s95
      %s113 = sphi 0, %s113
      %s115 = sphi 0, %s113
      %s116 = sphi 0, %s115
      %s130 = sphi 0, %s116
      %s134 = sphi 0, %s134
      %s136 = sphi 0, %s134
      %s137 = sphi 0, %s136
      %s151 = sphi 0, %s137
      %s155 = sphi 0, %s155
      %s157 = sphi 0, %s155
      %s158 = sphi 0, %s157
      %s172 = sphi 0, %s158
      %s178 = sphi 0, %s180
      %s181 = sphi 0, %s178
      %s182 = sphi 0, %s181
      %s198 = sphi 0, %s182
    $region4: #{tpu_custom_call.1} parent=1 // loop_header_branch
      %19 = sbr.rel (%p17) target = $region8
    $region5: #{tpu_custom_call.1} parent=1 // loop_body
      %s21 = ssub.s32 %s16, 1
      %s22 = ssub.s32 %s16, 2
      %s23 = sadd.s32 %s16, 1
      %s24 = ssub.s32 %s16, %s23
      %p25 = scmp.eq.s32.totalorder %s24, 0
      %s27 = sadd.s32 %s26, 1
      %s28 = scalar_select %p25, %s26, %s27
      %p31 = pneg %p25
      %p32 = scmp.eq.s32.totalorder %s16, 2
      %p33 = por %p31, %p32
      %p34 = scmp.ne.s32.totalorder %s26, %s29
      %p35 = scmp.eq.s32.totalorder %s16, 0
      %p36 = por %p34, %p35
      %p37 = scmp.ne.s32.totalorder %s26, %s29
      %p38 = scmp.eq.s32.totalorder %s21, 2
      %p39 = por %p37, %p38
      %p40 = scmp.ne.s32.totalorder %s29, %s30
      %p41 = scmp.eq.s32.totalorder %s21, 0
      %p42 = por %p40, %p41
      %p43 = scmp.ne.s32.totalorder %s29, %s30
      %p44 = scmp.eq.s32.totalorder %s22, 2
      %p45 = por %p43, %p44
      %p47 = scmp.ne.s32.totalorder %s30, %s46
      %p48 = scmp.eq.s32.totalorder %s22, 0
      %p49 = por %p47, %p48
      %s51 = sadd.s32 %s50, 1
      %p54 = scmp.eq.s32.totalorder %s16, 2
      %p55 = scmp.ne.s32.totalorder %s50, %s52
      %p56 = scmp.eq.s32.totalorder %s16, 0
      %p57 = por %p55, %p56
      %p58 = scmp.ne.s32.totalorder %s50, %s52
      %p59 = scmp.eq.s32.totalorder %s21, 2
      %p60 = por %p58, %p59
      %p61 = scmp.ne.s32.totalorder %s52, %s53
      %p62 = scmp.eq.s32.totalorder %s21, 0
      %p63 = por %p61, %p62
      %p64 = scmp.ne.s32.totalorder %s52, %s53
      %p65 = scmp.eq.s32.totalorder %s22, 2
      %p66 = por %p64, %p65
      %p68 = scmp.ne.s32.totalorder %s53, %s67
      %p69 = scmp.eq.s32.totalorder %s22, 0
      %p70 = por %p68, %p69
      %s72 = sadd.s32 %s71, 1
      %p75 = scmp.eq.s32.totalorder %s16, 2
      %p76 = scmp.ne.s32.totalorder %s71, %s73
      %p77 = scmp.eq.s32.totalorder %s16, 0
      %p78 = por %p76, %p77
      %p79 = scmp.ne.s32.totalorder %s71, %s73
      %p80 = scmp.eq.s32.totalorder %s21, 2
      %p81 = por %p79, %p80
      %p82 = scmp.ne.s32.totalorder %s73, %s74
      %p83 = scmp.eq.s32.totalorder %s21, 0
      %p84 = por %p82, %p83
      %p85 = scmp.ne.s32.totalorder %s73, %s74
      %p86 = scmp.eq.s32.totalorder %s22, 2
      %p87 = por %p85, %p86
      %p89 = scmp.ne.s32.totalorder %s74, %s88
      %p90 = scmp.eq.s32.totalorder %s22, 0
      %p91 = por %p89, %p90
      %s93 = sadd.s32 %s92, 1
      %p96 = scmp.eq.s32.totalorder %s16, 2
      %p97 = scmp.ne.s32.totalorder %s92, %s94
      %p98 = scmp.eq.s32.totalorder %s16, 0
      %p99 = por %p97, %p98
      %p100 = scmp.ne.s32.totalorder %s92, %s94
      %p101 = scmp.eq.s32.totalorder %s21, 2
      %p102 = por %p100, %p101
      %p103 = scmp.ne.s32.totalorder %s94, %s95
      %p104 = scmp.eq.s32.totalorder %s21, 0
      %p105 = por %p103, %p104
      %p106 = scmp.ne.s32.totalorder %s94, %s95
      %p107 = scmp.eq.s32.totalorder %s22, 2
      %p108 = por %p106, %p107
      %p110 = scmp.ne.s32.totalorder %s95, %s109
      %p111 = scmp.eq.s32.totalorder %s22, 0
      %p112 = por %p110, %p111
      %s114 = sadd.s32 %s113, 1
      %p117 = scmp.eq.s32.totalorder %s16, 2
      %p118 = scmp.ne.s32.totalorder %s113, %s115
      %p119 = scmp.eq.s32.totalorder %s16, 0
      %p120 = por %p118, %p119
      %p121 = scmp.ne.s32.totalorder %s113, %s115
      %p122 = scmp.eq.s32.totalorder %s21, 2
      %p123 = por %p121, %p122
      %p124 = scmp.ne.s32.totalorder %s115, %s116
      %p125 = scmp.eq.s32.totalorder %s21, 0
      %p126 = por %p124, %p125
      %p127 = scmp.ne.s32.totalorder %s115, %s116
      %p128 = scmp.eq.s32.totalorder %s22, 2
      %p129 = por %p127, %p128
      %p131 = scmp.ne.s32.totalorder %s116, %s130
      %p132 = scmp.eq.s32.totalorder %s22, 0
      %p133 = por %p131, %p132
      %s135 = sadd.s32 %s134, 1
      %p138 = scmp.eq.s32.totalorder %s16, 2
      %p139 = scmp.ne.s32.totalorder %s134, %s136
      %p140 = scmp.eq.s32.totalorder %s16, 0
      %p141 = por %p139, %p140
      %p142 = scmp.ne.s32.totalorder %s134, %s136
      %p143 = scmp.eq.s32.totalorder %s21, 2
      %p144 = por %p142, %p143
      %p145 = scmp.ne.s32.totalorder %s136, %s137
      %p146 = scmp.eq.s32.totalorder %s21, 0
      %p147 = por %p145, %p146
      %p148 = scmp.ne.s32.totalorder %s136, %s137
      %p149 = scmp.eq.s32.totalorder %s22, 2
      %p150 = por %p148, %p149
      %p152 = scmp.ne.s32.totalorder %s137, %s151
      %p153 = scmp.eq.s32.totalorder %s22, 0
      %p154 = por %p152, %p153
      %s156 = sadd.s32 %s155, 1
      %p159 = scmp.eq.s32.totalorder %s16, 2
      %p160 = scmp.ne.s32.totalorder %s155, %s157
      %p161 = scmp.eq.s32.totalorder %s16, 0
      %p162 = por %p160, %p161
      %p163 = scmp.ne.s32.totalorder %s155, %s157
      %p164 = scmp.eq.s32.totalorder %s21, 2
      %p165 = por %p163, %p164
      %p166 = scmp.ne.s32.totalorder %s157, %s158
      %p167 = scmp.eq.s32.totalorder %s21, 0
      %p168 = por %p166, %p167
      %p169 = scmp.ne.s32.totalorder %s157, %s158
      %p170 = scmp.eq.s32.totalorder %s22, 2
      %p171 = por %p169, %p170
      %p173 = scmp.ne.s32.totalorder %s158, %s172
      %p174 = scmp.eq.s32.totalorder %s22, 0
      %p175 = por %p173, %p174
      %s176 = ssub.s32 %s16, %s23
      %p177 = scmp.eq.s32.totalorder %s176, 0
      %s179 = sadd.s32 %s178, 1
      %s180 = scalar_select %p177, %s178, %s179
      %p183 = pneg %p177
      %p184 = scmp.eq.s32.totalorder %s16, 2
      %p185 = por %p183, %p184
      %p186 = scmp.ne.s32.totalorder %s178, %s181
      %p187 = scmp.eq.s32.totalorder %s16, 0
      %p188 = por %p186, %p187
      %p189 = scmp.ne.s32.totalorder %s178, %s181
      %p190 = scmp.eq.s32.totalorder %s21, 2
      %p191 = por %p189, %p190
      %p192 = scmp.ne.s32.totalorder %s181, %s182
      %p193 = scmp.eq.s32.totalorder %s21, 0
      %p194 = por %p192, %p193
      %p195 = scmp.ne.s32.totalorder %s181, %s182
      %p196 = scmp.eq.s32.totalorder %s22, 2
      %p197 = por %p195, %p196
      %p199 = scmp.ne.s32.totalorder %s182, %s198
      %p200 = scmp.eq.s32.totalorder %s22, 0
      %p201 = por %p199, %p200
      %p202 = scmp.le.s32.totalorder 1, %s16
      %p203 = scmp.lt.s32.totalorder %s16, 4
      %p204 = pnand %p202, %p203
      %p205 = pneg %p204
      // Predicated region
      $region9: #{tpu_custom_call.1} parent=5 // pred_check
        _
      $region10: #{tpu_custom_call.1} parent=5 // pred_check_branch
        %207 = sbr.rel (%p204) target = $region12
      $region11: #{tpu_custom_call.1} parent=5 // pred_region
        %s208 = ssub.s32 %s16, 1
        // Predicated region
        $region13: #{tpu_custom_call.1} parent=11 // pred_check
          %p209 = pneg %p63
        $region14: #{tpu_custom_call.1} parent=11 // pred_check_branch
          %211 = sbr.rel (%p209) target = $region16
        $region15: #{tpu_custom_call.1} parent=11 // pred_region
          _
        $region16: #{tpu_custom_call.1} parent=11 // pred_fallthru
          _
        // Predicated region
        $region17: #{tpu_custom_call.1} parent=11 // pred_check
          %p212 = pneg %p84
        $region18: #{tpu_custom_call.1} parent=11 // pred_check_branch
          %214 = sbr.rel (%p212) target = $region20
        $region19: #{tpu_custom_call.1} parent=11 // pred_region
          _
        $region20: #{tpu_custom_call.1} parent=11 // pred_fallthru
          _
        // Predicated region
        $region21: #{tpu_custom_call.1} parent=11 // pred_check
          %p215 = pneg %p105
        $region22: #{tpu_custom_call.1} parent=11 // pred_check_branch
          %217 = sbr.rel (%p215) target = $region24
        $region23: #{tpu_custom_call.1} parent=11 // pred_region
          _
        $region24: #{tpu_custom_call.1} parent=11 // pred_fallthru
          _
        // Predicated region
        $region25: #{tpu_custom_call.1} parent=11 // pred_check
          %p218 = pneg %p126
        $region26: #{tpu_custom_call.1} parent=11 // pred_check_branch
          %220 = sbr.rel (%p218) target = $region28
        $region27: #{tpu_custom_call.1} parent=11 // pred_region
          _
        $region28: #{tpu_custom_call.1} parent=11 // pred_fallthru
          _
        // Predicated region
        $region29: #{tpu_custom_call.1} parent=11 // pred_check
          %p221 = pneg %p147
        $region30: #{tpu_custom_call.1} parent=11 // pred_check_branch
          %223 = sbr.rel (%p221) target = $region32
        $region31: #{tpu_custom_call.1} parent=11 // pred_region
          _
        $region32: #{tpu_custom_call.1} parent=11 // pred_fallthru
          _
        // Predicated region
        $region33: #{tpu_custom_call.1} parent=11 // pred_check
          %p224 = pneg %p168
        $region34: #{tpu_custom_call.1} parent=11 // pred_check_branch
          %226 = sbr.rel (%p224) target = $region36
        $region35: #{tpu_custom_call.1} parent=11 // pred_region
          _
        $region36: #{tpu_custom_call.1} parent=11 // pred_fallthru
          _
      $region12: #{tpu_custom_call.1} parent=5 // pred_fallthru
        _
      %p227 = scmp.lt.s32.totalorder %s16, 3
      // Predicated region
      $region37: #{tpu_custom_call.1} parent=5 // pred_check
        %p228 = pneg %p227
      $region38: #{tpu_custom_call.1} parent=5 // pred_check_branch
        %230 = sbr.rel (%p228) target = $region40
      $region39: #{tpu_custom_call.1} parent=5 // pred_region
        // Predicated region
        $region41: #{tpu_custom_call.1} parent=39 // pred_check
          %p231 = pneg %p36
        $region42: #{tpu_custom_call.1} parent=39 // pred_check_branch
          %233 = sbr.rel (%p231) target = $region44
        $region43: #{tpu_custom_call.1} parent=39 // pred_region
          %s234 = smul.u32 4, %s16
          %p235 = scmp.lt.s32.totalorder %s234, 11
          %s236 = scalar_select %p235, %s234, 11
          %s237 = smul.addr %s236, 4
          %s238 = scalar_lea.vmem %s0, %s237
          %s239 = smul.u32 4, %s16
        $region44: #{tpu_custom_call.1} parent=39 // pred_fallthru
          _
      $region40: #{tpu_custom_call.1} parent=5 // pred_fallthru
        _
      %p240 = scmp.le.s32.totalorder 1, %s16
      %p241 = scmp.lt.s32.totalorder %s16, 4
      %p242 = pnand %p240, %p241
      %p243 = pneg %p242
      // Predicated region
      $region45: #{tpu_custom_call.1} parent=5 // pred_check
        _
      $region46: #{tpu_custom_call.1} parent=5 // pred_check_branch
        %245 = sbr.rel (%p242) target = $region48
      $region47: #{tpu_custom_call.1} parent=5 // pred_region
        %s246 = ssub.s32 %s16, 1
        %s247 = smul.u32 4, %s21
        %p248 = scmp.lt.s32.totalorder %s247, 11
        %s249 = scalar_select %p248, %s247, 11
        %s250 = smul.addr %s249, 4
        %s251 = scalar_lea.vmem %s0, %s250
        %p252 = pneg %p42
        %p253 = pneg %p39
        %p254 = pneg %p63
        %p255 = pneg %p60
        %p256 = pneg %p84
        %p257 = pneg %p81
        %p258 = pneg %p105
        %p259 = pneg %p102
        %p260 = pneg %p126
        %p261 = pneg %p123
        %p262 = pneg %p147
        %p263 = pneg %p144
        %p264 = pneg %p168
        %p265 = pneg %p165
        %p266 = pneg %p194
        %p267 = pneg %p191
        %s268 = sand.u32 %s181, 1
        %s269 = scalar_lea.sflag [#allocation3], %s268
        %s270 = sand.u32 %s181, 1
        %s271 = smul.addr %s270, 2
        %s272 = scalar_lea.vmem [#allocation2], %s271
        %s273 = smul.u32 4, %s21
        %p274 = scmp.lt.s32.totalorder %s273, 11
        %s275 = scalar_select %p274, %s273, 11
        %s276 = smul.addr %s275, 4
        %s277 = scalar_lea.vmem %s0, %s276
        %s278 = smul.u32 4, %s21
        %v280 = vld [vmem:[%s277] sm:$0xf]
        %v281 = vld [vmem:[%s277 + $0x4] sm:$0xf]
        %v282 = vld [vmem:[%s277 + $0x8] sm:$0xf]
        %v283 = vld [vmem:[%s277 + $0xc] sm:$0xf]
        %v284 = vld [vmem:[%s1] sm:$0xf]
        %v285 = vld [vmem:[%s1 + $0x4] sm:$0xf]
        %v286 = vld [vmem:[%s2] sm:$0x1]
        %v287 = vld [vmem:[%s3] sm:$0xff]
        %v288 = vld [vmem:[%s3 + $0x8] sm:$0xff]
        %v289 = vld [vmem:[%s3 + $0x10] sm:$0xff]
        %v290 = vld [vmem:[%s3 + $0x18] sm:$0xff]
        %v291 = vld [vmem:[%s3 + $0x20] sm:$0xff]
        %v292 = vld [vmem:[%s3 + $0x28] sm:$0xff]
        %v293 = vld [vmem:[%s3 + $0x30] sm:$0xff]
        %v294 = vld [vmem:[%s3 + $0x38] sm:$0xff]
        %v295 = vld [vmem:[%s3 + $0x40] sm:$0xff]
        %v296 = vld [vmem:[%s3 + $0x48] sm:$0xff]
        %v297 = vld [vmem:[%s3 + $0x50] sm:$0xff]
        %v298 = vld [vmem:[%s3 + $0x58] sm:$0xff]
        %v299 = vld [vmem:[%s3 + $0x60] sm:$0xff]
        %v300 = vld [vmem:[%s3 + $0x68] sm:$0xff]
        %v301 = vld [vmem:[%s3 + $0x70] sm:$0xff]
        %v302 = vld [vmem:[%s3 + $0x78] sm:$0xff]
        %v303 = vld [vmem:[%s4] sm:$0x3]
        %v304 = vld [vmem:[%s5] sm:$0xff]
        %v305 = vld [vmem:[%s5 + $0x8] sm:$0xf]
        %v306 = vld [vmem:[%s5 + $0xc] sm:$0xff]
        %v307 = vld [vmem:[%s5 + $0x14] sm:$0xf]
        %v308 = vld [vmem:[%s5 + $0x18] sm:$0xff]
        %v309 = vld [vmem:[%s5 + $0x20] sm:$0xf]
        %v310 = vld [vmem:[%s5 + $0x24] sm:$0xff]
        %v311 = vld [vmem:[%s5 + $0x2c] sm:$0xf]
        %v312 = vld [vmem:[%s5 + $0x30] sm:$0xff]
        %v313 = vld [vmem:[%s5 + $0x38] sm:$0xf]
        %v314 = vld [vmem:[%s5 + $0x3c] sm:$0xff]
        %v315 = vld [vmem:[%s5 + $0x44] sm:$0xf]
        %v316 = vld [vmem:[%s5 + $0x48] sm:$0xff]
        %v317 = vld [vmem:[%s5 + $0x50] sm:$0xf]
        %v318 = vld [vmem:[%s5 + $0x54] sm:$0xff]
        %v319 = vld [vmem:[%s5 + $0x5c] sm:$0xf]
        %v320 = vld [vmem:[%s5 + $0x60] sm:$0xff]
        %v321 = vld [vmem:[%s5 + $0x68] sm:$0xf]
        %v322 = vld [vmem:[%s5 + $0x6c] sm:$0xff]
        %v323 = vld [vmem:[%s5 + $0x74] sm:$0xf]
        %v324 = vld [vmem:[%s5 + $0x78] sm:$0xff]
        %v325 = vld [vmem:[%s5 + $0x80] sm:$0xf]
        %v326 = vld [vmem:[%s5 + $0x84] sm:$0xff]
        %v327 = vld [vmem:[%s5 + $0x8c] sm:$0xf]
        %v328 = vld [vmem:[%s5 + $0x90] sm:$0xff]
        %v329 = vld [vmem:[%s5 + $0x98] sm:$0xf]
        %v330 = vld [vmem:[%s5 + $0x9c] sm:$0xff]
        %v331 = vld [vmem:[%s5 + $0xa4] sm:$0xf]
        %v332 = vld [vmem:[%s5 + $0xa8] sm:$0xff]
        %v333 = vld [vmem:[%s5 + $0xb0] sm:$0xf]
        %v334 = vld [vmem:[%s5 + $0xb4] sm:$0xff]
        %v335 = vld [vmem:[%s5 + $0xbc] sm:$0xf]
        %v336 = vld [vmem:[%s5 + $0xc0] sm:$0xff]
        %v337 = vld [vmem:[%s5 + $0xc8] sm:$0xf]
        %v338 = vld [vmem:[%s5 + $0xcc] sm:$0xff]
        %v339 = vld [vmem:[%s5 + $0xd4] sm:$0xf]
        %v341 = vlaneseq
        %v342 = vshrl.u32 %v341, 7
        %v343 = vsub.s32 0, %v342
        %v344 = vrot.slane %v286, %v343
        %v350 = vunpack.c.l.b16 %v280
        %v351 = vunpack.c.l.b16 %v281
        %v352 = vunpack.c.l.b16 %v282
        %v353 = vunpack.c.l.b16 %v283
        %v354 = vpack.c.b16 %v351, %v350
        %v355 = vpack.c.b16 %v353, %v352
        %v358 = vunpack.c.l.b16 %v284
        %v359 = vunpack.c.l.b16 %v285
        %v360 = vpack.c.b16 %v359, %v358
        %vm361 = vcmask 121856
        %v363 = vsel %vm361, %v354, 0
        %v366 = vsel %vm361, %v355, 0
        %vm368 = vcmask 1046528
        %vm369 = vcmask 1047552
        %v370 = vsel %vm368, 4294967295, 65535
        %v371 = vsel %vm369, %v370, 0
        %v373 = vand.u32 %v360, %v371
        %375 = vmatprep.subr.bf16.mxu0 0
        %376 = vmatpush1.bf16.msra.mxu0 0
        %377 = vmatprep.subr.bf16.mxu0 0
        %378 = vmatpush1.bf16.msra.mxu0 0
        %379 = vmatprep.subr.bf16.mxu0 0
        %380 = vmatpush1.bf16.msra.mxu0 0
        %381 = vmatprep.subr.bf16.mxu0 0
        %382 = vmatpush1.bf16.msra.mxu0 0
        %383 = vmatprep.subr.bf16.mxu0 0
        %384 = vmatpush1.bf16.msra.mxu0 0
        %385 = vmatprep.subr.bf16.mxu0 0
        %386 = vmatpush1.bf16.msra.mxu0 0
        %387 = vmatprep.subr.bf16.mxu0 0
        %388 = vmatpush1.bf16.msra.mxu0 0
        %389 = vmatprep.subr.bf16.mxu0 0
        %390 = vmatpush1.bf16.msra.mxu0 %v373
        %391 = vmatprep.subr.bf16.mxu0 0
        %392 = vmatpush2.bf16.msra.mxu0 0
        %393 = vmatprep.subr.bf16.mxu0 0
        %394 = vmatpush2.bf16.msra.mxu0 0
        %395 = vmatprep.subr.bf16.mxu0 0
        %396 = vmatpush2.bf16.msra.mxu0 0
        %397 = vmatprep.subr.bf16.mxu0 0
        %398 = vmatpush2.bf16.msra.mxu0 0
        %399 = vmatprep.subr.bf16.mxu0 0
        %400 = vmatpush2.bf16.msra.mxu0 0
        %401 = vmatprep.subr.bf16.mxu0 0
        %402 = vmatpush2.bf16.msra.mxu0 0
        %403 = vmatprep.subr.bf16.mxu0 0
        %404 = vmatpush2.bf16.msra.mxu0 0
        %405 = vmatprep.subr.bf16.mxu0 0
        %406 = vmatpush2.bf16.msra.mxu0 0
        %407 = vmatprep.mubr.bf16.mxu0 0
        %408 = vmatmul.mubr.bf16.gmra.mxu0 %v363
        %v409 = vpop.f32.mrf.mxu0
        %v410 = vadd.f32 %v344, %v409
        %v411 = vpop.f32.mrf.mxu0
        %v412 = vpop.f32.mrf.mxu0
        %v413 = vadd.f32 %v344, %v412
        %v414 = vpop.f32.mrf.mxu0
        %415 = vmatprep.mubr.bf16.mxu0 0
        %416 = vmatmul.mubr.bf16.gmra.mxu0 %v366
        %v417 = vpop.f32.mrf.mxu0
        %v418 = vadd.f32 %v344, %v417
        %v419 = vpop.f32.mrf.mxu0
        %v420 = vpop.f32.mrf.mxu0
        %v421 = vadd.f32 %v344, %v420
        %v422 = vpop.f32.mrf.mxu0
        %423 = vdwg.mxu0
        %v424 = vmax.f32 %v410, 0.0
        %v425 = vmax.f32 %v413, 0.0
        %v426 = vmax.f32 %v418, 0.0
        %v427 = vmax.f32 %v421, 0.0
        %v428 = vpack.c.bf16 %v425, %v424
        %v429 = vpack.c.bf16 %v427, %v426
        %v431 = vlaneseq
        %v432 = vshrl.u32 %v431, 7
        %v433 = vsub.s32 0, %v432
        %v434 = vrot.slane %v303, %v433
        %v435 = vlaneseq
        %v436 = vshrl.u32 %v435, 7
        %v437 = vsub.s32 1, %v436
        %v438 = vrot.slane %v303, %v437
        %v457 = vunpack.c.l.b16 %v287
        %v458 = vunpack.c.h.b16 %v287
        %v459 = vunpack.c.l.b16 %v288
        %v460 = vunpack.c.h.b16 %v288
        %v461 = vunpack.c.l.b16 %v289
        %v462 = vunpack.c.h.b16 %v289
        %v463 = vunpack.c.l.b16 %v290
        %v464 = vunpack.c.h.b16 %v290
        %v465 = vunpack.c.l.b16 %v291
        %v466 = vunpack.c.h.b16 %v291
        %v467 = vunpack.c.l.b16 %v292
        %v468 = vunpack.c.h.b16 %v292
        %v469 = vunpack.c.l.b16 %v293
        %v470 = vunpack.c.h.b16 %v293
        %v471 = vunpack.c.l.b16 %v294
        %v472 = vunpack.c.h.b16 %v294
        %v473 = vunpack.c.l.b16 %v295
        %v474 = vunpack.c.h.b16 %v295
        %v475 = vunpack.c.l.b16 %v296
        %v476 = vunpack.c.h.b16 %v296
        %v477 = vunpack.c.l.b16 %v297
        %v478 = vunpack.c.h.b16 %v297
        %v479 = vunpack.c.l.b16 %v298
        %v480 = vunpack.c.h.b16 %v298
        %v481 = vunpack.c.l.b16 %v299
        %v482 = vunpack.c.h.b16 %v299
        %v483 = vunpack.c.l.b16 %v300
        %v484 = vunpack.c.h.b16 %v300
        %v485 = vunpack.c.l.b16 %v301
        %v486 = vunpack.c.h.b16 %v301
        %v487 = vunpack.c.l.b16 %v302
        %v488 = vunpack.c.h.b16 %v302
        %v489 = vpack.c.b16 %v459, %v457
        %v490 = vpack.c.b16 %v460, %v458
        %v491 = vpack.c.b16 %v463, %v461
        %v492 = vpack.c.b16 %v464, %v462
        %v493 = vpack.c.b16 %v467, %v465
        %v494 = vpack.c.b16 %v468, %v466
        %v495 = vpack.c.b16 %v471, %v469
        %v496 = vpack.c.b16 %v472, %v470
        %v497 = vpack.c.b16 %v475, %v473
        %v498 = vpack.c.b16 %v476, %v474
        %v499 = vpack.c.b16 %v479, %v477
        %v500 = vpack.c.b16 %v480, %v478
        %v501 = vpack.c.b16 %v483, %v481
        %v502 = vpack.c.b16 %v484, %v482
        %v503 = vpack.c.b16 %v487, %v485
        %v504 = vpack.c.b16 %v488, %v486
        %521 = vmatprep.subr.bf16.mxu0 %v504
        %522 = vmatpush1.bf16.msra.mxu0 %v503
        %523 = vmatprep.subr.bf16.mxu0 %v502
        %524 = vmatpush1.bf16.msra.mxu0 %v501
        %525 = vmatprep.subr.bf16.mxu0 %v500
        %526 = vmatpush1.bf16.msra.mxu0 %v499
        %527 = vmatprep.subr.bf16.mxu0 %v498
        %528 = vmatpush1.bf16.msra.mxu0 %v497
        %529 = vmatprep.subr.bf16.mxu0 %v496
        %530 = vmatpush1.bf16.msra.mxu0 %v495
        %531 = vmatprep.subr.bf16.mxu0 %v494
        %532 = vmatpush1.bf16.msra.mxu0 %v493
        %533 = vmatprep.subr.bf16.mxu0 %v492
        %534 = vmatpush1.bf16.msra.mxu0 %v491
        %535 = vmatprep.subr.bf16.mxu0 %v490
        %536 = vmatpush1.bf16.msra.mxu0 %v489
        %537 = vmatprep.subr.bf16.mxu0 0
        %538 = vmatpush2.bf16.msra.mxu0 0
        %539 = vmatprep.subr.bf16.mxu0 0
        %540 = vmatpush2.bf16.msra.mxu0 0
        %541 = vmatprep.subr.bf16.mxu0 0
        %542 = vmatpush2.bf16.msra.mxu0 0
        %543 = vmatprep.subr.bf16.mxu0 0
        %544 = vmatpush2.bf16.msra.mxu0 0
        %545 = vmatprep.subr.bf16.mxu0 0
        %546 = vmatpush2.bf16.msra.mxu0 0
        %547 = vmatprep.subr.bf16.mxu0 0
        %548 = vmatpush2.bf16.msra.mxu0 0
        %549 = vmatprep.subr.bf16.mxu0 0
        %550 = vmatpush2.bf16.msra.mxu0 0
        %551 = vmatprep.subr.bf16.mxu0 0
        %552 = vmatpush2.bf16.msra.mxu0 0
        %553 = vmatprep.mubr.bf16.mxu0 0
        %554 = vmatmul.mubr.bf16.gmra.mxu0 %v428
        %v555 = vpop.f32.mrf.mxu0
        %v556 = vadd.f32 %v434, %v555
        %v557 = vpop.f32.mrf.mxu0
        %v558 = vadd.f32 %v438, %v557
        %v559 = vpop.f32.mrf.mxu0
        %v560 = vadd.f32 %v434, %v559
        %v561 = vpop.f32.mrf.mxu0
        %v562 = vadd.f32 %v438, %v561
        %563 = vmatprep.mubr.bf16.mxu0 0
        %564 = vmatmul.mubr.bf16.gmra.mxu0 %v429
        %v565 = vpop.f32.mrf.mxu0
        %v566 = vadd.f32 %v434, %v565
        %v567 = vpop.f32.mrf.mxu0
        %v568 = vadd.f32 %v438, %v567
        %v569 = vpop.f32.mrf.mxu0
        %v570 = vadd.f32 %v434, %v569
        %v571 = vpop.f32.mrf.mxu0
        %v572 = vadd.f32 %v438, %v571
        %573 = vdwg.mxu0
        %v574 = vmax.f32 %v556, 0.0
        %v575 = vmax.f32 %v558, 0.0
        %v576 = vmax.f32 %v560, 0.0
        %v577 = vmax.f32 %v562, 0.0
        %v578 = vmax.f32 %v566, 0.0
        %v579 = vmax.f32 %v568, 0.0
        %v580 = vmax.f32 %v570, 0.0
        %v581 = vmax.f32 %v572, 0.0
        %v582 = vpack.c.bf16 %v576, %v574
        %v583 = vpack.c.bf16 %v577, %v575
        %v584 = vpack.c.bf16 %v580, %v578
        %v585 = vpack.c.bf16 %v581, %v579
        %v622 = vunpack.c.l.b16 %v304
        %v623 = vunpack.c.h.b16 %v304
        %v624 = vunpack.c.l.b16 %v305
        %v625 = vunpack.c.l.b16 %v306
        %v626 = vunpack.c.h.b16 %v306
        %v627 = vunpack.c.l.b16 %v307
        %v628 = vunpack.c.l.b16 %v308
        %v629 = vunpack.c.h.b16 %v308
        %v630 = vunpack.c.l.b16 %v309
        %v631 = vunpack.c.l.b16 %v310
        %v632 = vunpack.c.h.b16 %v310
        %v633 = vunpack.c.l.b16 %v311
        %v634 = vunpack.c.l.b16 %v312
        %v635 = vunpack.c.h.b16 %v312
        %v636 = vunpack.c.l.b16 %v313
        %v637 = vunpack.c.l.b16 %v314
        %v638 = vunpack.c.h.b16 %v314
        %v639 = vunpack.c.l.b16 %v315
        %v640 = vunpack.c.l.b16 %v316
        %v641 = vunpack.c.h.b16 %v316
        %v642 = vunpack.c.l.b16 %v317
        %v643 = vunpack.c.l.b16 %v318
        %v644 = vunpack.c.h.b16 %v318
        %v645 = vunpack.c.l.b16 %v319
        %v646 = vunpack.c.l.b16 %v320
        %v647 = vunpack.c.h.b16 %v320
        %v648 = vunpack.c.l.b16 %v321
        %v649 = vunpack.c.l.b16 %v322
        %v650 = vunpack.c.h.b16 %v322
        %v651 = vunpack.c.l.b16 %v323
        %v652 = vunpack.c.l.b16 %v324
        %v653 = vunpack.c.h.b16 %v324
        %v654 = vunpack.c.l.b16 %v325
        %v655 = vunpack.c.l.b16 %v326
        %v656 = vunpack.c.h.b16 %v326
        %v657 = vunpack.c.l.b16 %v327
        %v658 = vunpack.c.l.b16 %v328
        %v659 = vunpack.c.h.b16 %v328
        %v660 = vunpack.c.l.b16 %v329
        %v661 = vunpack.c.l.b16 %v330
        %v662 = vunpack.c.h.b16 %v330
        %v663 = vunpack.c.l.b16 %v331
        %v664 = vunpack.c.l.b16 %v332
        %v665 = vunpack.c.h.b16 %v332
        %v666 = vunpack.c.l.b16 %v333
        %v667 = vunpack.c.l.b16 %v334
        %v668 = vunpack.c.h.b16 %v334
        %v669 = vunpack.c.l.b16 %v335
        %v670 = vunpack.c.l.b16 %v336
        %v671 = vunpack.c.h.b16 %v336
        %v672 = vunpack.c.l.b16 %v337
        %v673 = vunpack.c.l.b16 %v338
        %v674 = vunpack.c.h.b16 %v338
        %v675 = vunpack.c.l.b16 %v339
        %v676 = vpack.c.b16 %v625, %v622
        %v677 = vpack.c.b16 %v626, %v623
        %v678 = vpack.c.b16 %v627, %v624
        %v679 = vpack.c.b16 %v631, %v628
        %v680 = vpack.c.b16 %v632, %v629
        %v681 = vpack.c.b16 %v633, %v630
        %v682 = vpack.c.b16 %v637, %v634
        %v683 = vpack.c.b16 %v638, %v635
        %v684 = vpack.c.b16 %v639, %v636
        %v685 = vpack.c.b16 %v643, %v640
        %v686 = vpack.c.b16 %v644, %v641
        %v687 = vpack.c.b16 %v645, %v642
        %v688 = vpack.c.b16 %v649, %v646
        %v689 = vpack.c.b16 %v650, %v647
        %v690 = vpack.c.b16 %v651, %v648
        %v691 = vpack.c.b16 %v655, %v652
        %v692 = vpack.c.b16 %v656, %v653
        %v693 = vpack.c.b16 %v657, %v654
        %v694 = vpack.c.b16 %v661, %v658
        %v695 = vpack.c.b16 %v662, %v659
        %v696 = vpack.c.b16 %v663, %v660
        %v697 = vpack.c.b16 %v667, %v664
        %v698 = vpack.c.b16 %v668, %v665
        %v699 = vpack.c.b16 %v669, %v666
        %v700 = vpack.c.b16 %v673, %v670
        %v701 = vpack.c.b16 %v674, %v671
        %v702 = vpack.c.b16 %v675, %v672
        %vm730 = vcmask 130048
        %v732 = vsel %vm730, %v583, 0
        %v735 = vsel %vm730, %v585, 0
        %737 = vmatprep.subr.bf16.mxu0 %v698
        %738 = vmatpush1.bf16.msra.mxu0 %v697
        %739 = vmatprep.subr.bf16.mxu0 %v695
        %740 = vmatpush1.bf16.msra.mxu0 %v694
        %741 = vmatprep.subr.bf16.mxu0 %v692
        %742 = vmatpush1.bf16.msra.mxu0 %v691
        %743 = vmatprep.subr.bf16.mxu0 %v689
        %744 = vmatpush1.bf16.msra.mxu0 %v688
        %745 = vmatprep.subr.bf16.mxu0 %v686
        %746 = vmatpush1.bf16.msra.mxu0 %v685
        %747 = vmatprep.subr.bf16.mxu0 %v683
        %748 = vmatpush1.bf16.msra.mxu0 %v682
        %749 = vmatprep.subr.bf16.mxu0 %v680
        %750 = vmatpush1.bf16.msra.mxu0 %v679
        %751 = vmatprep.subr.bf16.mxu0 %v677
        %752 = vmatpush1.bf16.msra.mxu0 %v676
        %753 = vmatprep.subr.bf16.mxu0 0
        %754 = vmatpush2.bf16.msra.mxu0 0
        %755 = vmatprep.subr.bf16.mxu0 0
        %756 = vmatpush2.bf16.msra.mxu0 0
        %757 = vmatprep.subr.bf16.mxu0 0
        %758 = vmatpush2.bf16.msra.mxu0 0
        %759 = vmatprep.subr.bf16.mxu0 0
        %760 = vmatpush2.bf16.msra.mxu0 0
        %761 = vmatprep.subr.bf16.mxu0 0
        %762 = vmatpush2.bf16.msra.mxu0 0
        %763 = vmatprep.subr.bf16.mxu0 0
        %764 = vmatpush2.bf16.msra.mxu0 0
        %765 = vmatprep.subr.bf16.mxu0 0
        %766 = vmatpush2.bf16.msra.mxu0 0
        %767 = vmatprep.subr.bf16.mxu0 %v701
        %768 = vmatpush2.bf16.msra.mxu0 %v700
        %769 = vmatprep.mubr.bf16.mxu0 %v732
        %770 = vmatmul.mubr.bf16.gmra.mxu0 %v582
        %v771 = vpop.f32.mrf.mxu0
        %v772 = vadd.f32 0.0, %v771
        %v773 = vpop.f32.mrf.mxu0
        %v774 = vadd.f32 0.0, %v773
        %v775 = vpop.f32.mrf.mxu0
        %v776 = vadd.f32 0.0, %v775
        %v777 = vpop.f32.mrf.mxu0
        %v778 = vadd.f32 0.0, %v777
        %779 = vmatprep.mubr.bf16.mxu0 %v735
        %780 = vmatmul.mubr.bf16.gmra.mxu0 %v584
        %v781 = vpop.f32.mrf.mxu0
        %v782 = vadd.f32 0.0, %v781
        %v783 = vpop.f32.mrf.mxu0
        %v784 = vadd.f32 0.0, %v783
        %v785 = vpop.f32.mrf.mxu0
        %v786 = vadd.f32 0.0, %v785
        %v787 = vpop.f32.mrf.mxu0
        %v788 = vadd.f32 0.0, %v787
        %789 = vdwg.mxu0
        %790 = vmatprep.subr.bf16.mxu0 0
        %791 = vmatpush1.bf16.msra.mxu0 %v699
        %792 = vmatprep.subr.bf16.mxu0 0
        %793 = vmatpush1.bf16.msra.mxu0 %v696
        %794 = vmatprep.subr.bf16.mxu0 0
        %795 = vmatpush1.bf16.msra.mxu0 %v693
        %796 = vmatprep.subr.bf16.mxu0 0
        %797 = vmatpush1.bf16.msra.mxu0 %v690
        %798 = vmatprep.subr.bf16.mxu0 0
        %799 = vmatpush1.bf16.msra.mxu0 %v687
        %800 = vmatprep.subr.bf16.mxu0 0
        %801 = vmatpush1.bf16.msra.mxu0 %v684
        %802 = vmatprep.subr.bf16.mxu0 0
        %803 = vmatpush1.bf16.msra.mxu0 %v681
        %804 = vmatprep.subr.bf16.mxu0 0
        %805 = vmatpush1.bf16.msra.mxu0 %v678
        %806 = vmatprep.subr.bf16.mxu0 0
        %807 = vmatpush2.bf16.msra.mxu0 0
        %808 = vmatprep.subr.bf16.mxu0 0
        %809 = vmatpush2.bf16.msra.mxu0 0
        %810 = vmatprep.subr.bf16.mxu0 0
        %811 = vmatpush2.bf16.msra.mxu0 0
        %812 = vmatprep.subr.bf16.mxu0 0
        %813 = vmatpush2.bf16.msra.mxu0 0
        %814 = vmatprep.subr.bf16.mxu0 0
        %815 = vmatpush2.bf16.msra.mxu0 0
        %816 = vmatprep.subr.bf16.mxu0 0
        %817 = vmatpush2.bf16.msra.mxu0 0
        %818 = vmatprep.subr.bf16.mxu0 0
        %819 = vmatpush2.bf16.msra.mxu0 0
        %820 = vmatprep.subr.bf16.mxu0 0
        %821 = vmatpush2.bf16.msra.mxu0 %v702
        %822 = vmatprep.mubr.bf16.mxu0 %v732
        %823 = vmatmul.mubr.bf16.gmra.mxu0 %v582
        %v824 = vpop.f32.mrf.mxu0
        %v825 = vadd.f32 0.0, %v824
        %v826 = vpop.f32.mrf.mxu0
        %v827 = vpop.f32.mrf.mxu0
        %v828 = vadd.f32 0.0, %v827
        %v829 = vpop.f32.mrf.mxu0
        %830 = vmatprep.mubr.bf16.mxu0 %v735
        %831 = vmatmul.mubr.bf16.gmra.mxu0 %v584
        %v832 = vpop.f32.mrf.mxu0
        %v833 = vadd.f32 0.0, %v832
        %v834 = vpop.f32.mrf.mxu0
        %v835 = vpop.f32.mrf.mxu0
        %v836 = vadd.f32 0.0, %v835
        %v837 = vpop.f32.mrf.mxu0
        %838 = vdwg.mxu0
        %v839 = vlaneseq
        %v840 = vand.u32 %v839, 127
        %s841 = smul.u32 %s21, 32
        %v842 = vstv %s841
        %v843 = vadd.s32 %v840, %v842
        %vm844 = vcmp.lt.s32.totalorder %v843, 80
        %v845 = vsel %vm844, 1, 0
        %v846 = vcvt.s32.f32 %v845
        %vm847 = vcmask 261120
        %v849 = vsel %vm847, %v846, 0
        %851 = vmatprep.subr.mxu0 0.0
        %852 = vmatpush1.msra.mxu0 0.0
        %853 = vmatprep.subr.mxu0 0.0
        %854 = vmatpush1.msra.mxu0 0.0
        %855 = vmatprep.subr.mxu0 0.0
        %856 = vmatpush1.msra.mxu0 0.0
        %857 = vmatprep.subr.mxu0 0.0
        %858 = vmatpush1.msra.mxu0 0.0
        %859 = vmatprep.subr.mxu0 0.0
        %860 = vmatpush1.msra.mxu0 0.0
        %861 = vmatprep.subr.mxu0 0.0
        %862 = vmatpush1.msra.mxu0 0.0
        %863 = vmatprep.subr.mxu0 0.0
        %864 = vmatpush1.msra.mxu0 0.0
        %865 = vmatprep.subr.mxu0 0.0
        %866 = vmatpush1.msra.mxu0 0.0
        %867 = vmatprep.subr.mxu0 0.0
        %868 = vmatpush1.msra.mxu0 0.0
        %869 = vmatprep.subr.mxu0 0.0
        %870 = vmatpush1.msra.mxu0 0.0
        %871 = vmatprep.subr.mxu0 0.0
        %872 = vmatpush1.msra.mxu0 0.0
        %873 = vmatprep.subr.mxu0 0.0
        %874 = vmatpush1.msra.mxu0 0.0
        %875 = vmatprep.subr.mxu0 %v788
        %876 = vmatpush1.msra.mxu0 %v786
        %877 = vmatprep.subr.mxu0 %v784
        %878 = vmatpush1.msra.mxu0 %v782
        %879 = vmatprep.subr.mxu0 %v778
        %880 = vmatpush1.msra.mxu0 %v776
        %881 = vmatprep.subr.mxu0 %v774
        %882 = vmatpush1.msra.mxu0 %v772
        %883 = vmatprep.subr.mxu0 0.0
        %884 = vmatpush2.msra.mxu0 0.0
        %885 = vmatprep.subr.mxu0 0.0
        %886 = vmatpush2.msra.mxu0 0.0
        %887 = vmatprep.subr.mxu0 0.0
        %888 = vmatpush2.msra.mxu0 0.0
        %889 = vmatprep.subr.mxu0 0.0
        %890 = vmatpush2.msra.mxu0 0.0
        %891 = vmatprep.subr.mxu0 0.0
        %892 = vmatpush2.msra.mxu0 0.0
        %893 = vmatprep.subr.mxu0 0.0
        %894 = vmatpush2.msra.mxu0 0.0
        %895 = vmatprep.subr.mxu0 0.0
        %896 = vmatpush2.msra.mxu0 0.0
        %897 = vmatprep.subr.mxu0 0.0
        %898 = vmatpush2.msra.mxu0 0.0
        %899 = vmatprep.subr.mxu0 0.0
        %900 = vmatpush2.msra.mxu0 0.0
        %901 = vmatprep.subr.mxu0 0.0
        %902 = vmatpush2.msra.mxu0 0.0
        %903 = vmatprep.subr.mxu0 0.0
        %904 = vmatpush2.msra.mxu0 0.0
        %905 = vmatprep.subr.mxu0 0.0
        %906 = vmatpush2.msra.mxu0 0.0
        %907 = vmatprep.subr.mxu0 0.0
        %908 = vmatpush2.msra.mxu0 0.0
        %909 = vmatprep.subr.mxu0 0.0
        %910 = vmatpush2.msra.mxu0 0.0
        %911 = vmatprep.subr.mxu0 0.0
        %912 = vmatpush2.msra.mxu0 0.0
        %913 = vmatprep.subr.mxu0 0.0
        %914 = vmatpush2.msra.mxu0 0.0
        %915 = vmatprep.mubr.f32.mxu0 0.0
        %916 = vmatmul.mubr.f32.gmra.mxu0 %v849
        %v917 = vpop.f32.mrf.mxu0
        %v918 = vadd.f32 0.0, %v917
        %v919 = vpop.f32.mrf.mxu0
        %v920 = vadd.f32 0.0, %v919
        %921 = vdwg.mxu0
        %922 = vmatprep.subr.mxu0 0.0
        %923 = vmatpush1.msra.mxu0 0.0
        %924 = vmatprep.subr.mxu0 0.0
        %925 = vmatpush1.msra.mxu0 0.0
        %926 = vmatprep.subr.mxu0 0.0
        %927 = vmatpush1.msra.mxu0 0.0
        %928 = vmatprep.subr.mxu0 0.0
        %929 = vmatpush1.msra.mxu0 0.0
        %930 = vmatprep.subr.mxu0 0.0
        %931 = vmatpush1.msra.mxu0 0.0
        %932 = vmatprep.subr.mxu0 0.0
        %933 = vmatpush1.msra.mxu0 0.0
        %934 = vmatprep.subr.mxu0 0.0
        %935 = vmatpush1.msra.mxu0 0.0
        %936 = vmatprep.subr.mxu0 0.0
        %937 = vmatpush1.msra.mxu0 0.0
        %938 = vmatprep.subr.mxu0 0.0
        %939 = vmatpush1.msra.mxu0 0.0
        %940 = vmatprep.subr.mxu0 0.0
        %941 = vmatpush1.msra.mxu0 0.0
        %942 = vmatprep.subr.mxu0 0.0
        %943 = vmatpush1.msra.mxu0 0.0
        %944 = vmatprep.subr.mxu0 0.0
        %945 = vmatpush1.msra.mxu0 0.0
        %946 = vmatprep.subr.mxu0 0.0
        %947 = vmatpush1.msra.mxu0 %v836
        %948 = vmatprep.subr.mxu0 0.0
        %949 = vmatpush1.msra.mxu0 %v833
        %950 = vmatprep.subr.mxu0 0.0
        %951 = vmatpush1.msra.mxu0 %v828
        %952 = vmatprep.subr.mxu0 0.0
        %953 = vmatpush1.msra.mxu0 %v825
        %954 = vmatprep.subr.mxu0 0.0
        %955 = vmatpush2.msra.mxu0 0.0
        %956 = vmatprep.subr.mxu0 0.0
        %957 = vmatpush2.msra.mxu0 0.0
        %958 = vmatprep.subr.mxu0 0.0
        %959 = vmatpush2.msra.mxu0 0.0
        %960 = vmatprep.subr.mxu0 0.0
        %961 = vmatpush2.msra.mxu0 0.0
        %962 = vmatprep.subr.mxu0 0.0
        %963 = vmatpush2.msra.mxu0 0.0
        %964 = vmatprep.subr.mxu0 0.0
        %965 = vmatpush2.msra.mxu0 0.0
        %966 = vmatprep.subr.mxu0 0.0
        %967 = vmatpush2.msra.mxu0 0.0
        %968 = vmatprep.subr.mxu0 0.0
        %969 = vmatpush2.msra.mxu0 0.0
        %970 = vmatprep.subr.mxu0 0.0
        %971 = vmatpush2.msra.mxu0 0.0
        %972 = vmatprep.subr.mxu0 0.0
        %973 = vmatpush2.msra.mxu0 0.0
        %974 = vmatprep.subr.mxu0 0.0
        %975 = vmatpush2.msra.mxu0 0.0
        %976 = vmatprep.subr.mxu0 0.0
        %977 = vmatpush2.msra.mxu0 0.0
        %978 = vmatprep.subr.mxu0 0.0
        %979 = vmatpush2.msra.mxu0 0.0
        %980 = vmatprep.subr.mxu0 0.0
        %981 = vmatpush2.msra.mxu0 0.0
        %982 = vmatprep.subr.mxu0 0.0
        %983 = vmatpush2.msra.mxu0 0.0
        %984 = vmatprep.subr.mxu0 0.0
        %985 = vmatpush2.msra.mxu0 0.0
        %986 = vmatprep.mubr.f32.mxu0 0.0
        %987 = vmatmul.mubr.f32.gmra.mxu0 %v849
        %v988 = vpop.f32.mrf.mxu0
        %v989 = vadd.f32 0.0, %v988
        %v990 = vpop.f32.mrf.mxu0
        %991 = vdwg.mxu0
        %v992 = vmul.f32 %v772, %v772
        %v993 = vmul.f32 %v774, %v774
        %v994 = vmul.f32 %v825, %v825
        %v995 = vmul.f32 %v776, %v776
        %v996 = vmul.f32 %v778, %v778
        %v997 = vmul.f32 %v828, %v828
        %v998 = vmul.f32 %v782, %v782
        %v999 = vmul.f32 %v784, %v784
        %v1000 = vmul.f32 %v833, %v833
        %v1001 = vmul.f32 %v786, %v786
        %v1002 = vmul.f32 %v788, %v788
        %v1003 = vmul.f32 %v836, %v836
        %1004 = vmatprep.subr.mxu0 0.0
        %1005 = vmatpush1.msra.mxu0 0.0
        %1006 = vmatprep.subr.mxu0 0.0
        %1007 = vmatpush1.msra.mxu0 0.0
        %1008 = vmatprep.subr.mxu0 0.0
        %1009 = vmatpush1.msra.mxu0 0.0
        %1010 = vmatprep.subr.mxu0 0.0
        %1011 = vmatpush1.msra.mxu0 0.0
        %1012 = vmatprep.subr.mxu0 0.0
        %1013 = vmatpush1.msra.mxu0 0.0
        %1014 = vmatprep.subr.mxu0 0.0
        %1015 = vmatpush1.msra.mxu0 0.0
        %1016 = vmatprep.subr.mxu0 0.0
        %1017 = vmatpush1.msra.mxu0 0.0
        %1018 = vmatprep.subr.mxu0 0.0
        %1019 = vmatpush1.msra.mxu0 0.0
        %1020 = vmatprep.subr.mxu0 0.0
        %1021 = vmatpush1.msra.mxu0 0.0
        %1022 = vmatprep.subr.mxu0 0.0
        %1023 = vmatpush1.msra.mxu0 0.0
        %1024 = vmatprep.subr.mxu0 0.0
        %1025 = vmatpush1.msra.mxu0 0.0
        %1026 = vmatprep.subr.mxu0 0.0
        %1027 = vmatpush1.msra.mxu0 0.0
        %1028 = vmatprep.subr.mxu0 %v1002
        %1029 = vmatpush1.msra.mxu0 %v1001
        %1030 = vmatprep.subr.mxu0 %v999
        %1031 = vmatpush1.msra.mxu0 %v998
        %1032 = vmatprep.subr.mxu0 %v996
        %1033 = vmatpush1.msra.mxu0 %v995
        %1034 = vmatprep.subr.mxu0 %v993
        %1035 = vmatpush1.msra.mxu0 %v992
        %1036 = vmatprep.subr.mxu0 0.0
        %1037 = vmatpush2.msra.mxu0 0.0
        %1038 = vmatprep.subr.mxu0 0.0
        %1039 = vmatpush2.msra.mxu0 0.0
        %1040 = vmatprep.subr.mxu0 0.0
        %1041 = vmatpush2.msra.mxu0 0.0
        %1042 = vmatprep.subr.mxu0 0.0
        %1043 = vmatpush2.msra.mxu0 0.0
        %1044 = vmatprep.subr.mxu0 0.0
        %1045 = vmatpush2.msra.mxu0 0.0
        %1046 = vmatprep.subr.mxu0 0.0
        %1047 = vmatpush2.msra.mxu0 0.0
        %1048 = vmatprep.subr.mxu0 0.0
        %1049 = vmatpush2.msra.mxu0 0.0
        %1050 = vmatprep.subr.mxu0 0.0
        %1051 = vmatpush2.msra.mxu0 0.0
        %1052 = vmatprep.subr.mxu0 0.0
        %1053 = vmatpush2.msra.mxu0 0.0
        %1054 = vmatprep.subr.mxu0 0.0
        %1055 = vmatpush2.msra.mxu0 0.0
        %1056 = vmatprep.subr.mxu0 0.0
        %1057 = vmatpush2.msra.mxu0 0.0
        %1058 = vmatprep.subr.mxu0 0.0
        %1059 = vmatpush2.msra.mxu0 0.0
        %1060 = vmatprep.subr.mxu0 0.0
        %1061 = vmatpush2.msra.mxu0 0.0
        %1062 = vmatprep.subr.mxu0 0.0
        %1063 = vmatpush2.msra.mxu0 0.0
        %1064 = vmatprep.subr.mxu0 0.0
        %1065 = vmatpush2.msra.mxu0 0.0
        %1066 = vmatprep.subr.mxu0 0.0
        %1067 = vmatpush2.msra.mxu0 0.0
        %1068 = vmatprep.mubr.f32.mxu0 0.0
        %1069 = vmatmul.mubr.f32.gmra.mxu0 %v849
        %v1070 = vpop.f32.mrf.mxu0
        %v1071 = vadd.f32 0.0, %v1070
        %v1072 = vpop.f32.mrf.mxu0
        %v1073 = vadd.f32 0.0, %v1072
        %1074 = vdwg.mxu0
        %1075 = vmatprep.subr.mxu0 0.0
        %1076 = vmatpush1.msra.mxu0 0.0
        %1077 = vmatprep.subr.mxu0 0.0
        %1078 = vmatpush1.msra.mxu0 0.0
        %1079 = vmatprep.subr.mxu0 0.0
        %1080 = vmatpush1.msra.mxu0 0.0
        %1081 = vmatprep.subr.mxu0 0.0
        %1082 = vmatpush1.msra.mxu0 0.0
        %1083 = vmatprep.subr.mxu0 0.0
        %1084 = vmatpush1.msra.mxu0 0.0
        %1085 = vmatprep.subr.mxu0 0.0
        %1086 = vmatpush1.msra.mxu0 0.0
        %1087 = vmatprep.subr.mxu0 0.0
        %1088 = vmatpush1.msra.mxu0 0.0
        %1089 = vmatprep.subr.mxu0 0.0
        %1090 = vmatpush1.msra.mxu0 0.0
        %1091 = vmatprep.subr.mxu0 0.0
        %1092 = vmatpush1.msra.mxu0 0.0
        %1093 = vmatprep.subr.mxu0 0.0
        %1094 = vmatpush1.msra.mxu0 0.0
        %1095 = vmatprep.subr.mxu0 0.0
        %1096 = vmatpush1.msra.mxu0 0.0
        %1097 = vmatprep.subr.mxu0 0.0
        %1098 = vmatpush1.msra.mxu0 0.0
        %1099 = vmatprep.subr.mxu0 0.0
        %1100 = vmatpush1.msra.mxu0 %v1003
        %1101 = vmatprep.subr.mxu0 0.0
        %1102 = vmatpush1.msra.mxu0 %v1000
        %1103 = vmatprep.subr.mxu0 0.0
        %1104 = vmatpush1.msra.mxu0 %v997
        %1105 = vmatprep.subr.mxu0 0.0
        %1106 = vmatpush1.msra.mxu0 %v994
        %1107 = vmatprep.subr.mxu0 0.0
        %1108 = vmatpush2.msra.mxu0 0.0
        %1109 = vmatprep.subr.mxu0 0.0
        %1110 = vmatpush2.msra.mxu0 0.0
        %1111 = vmatprep.subr.mxu0 0.0
        %1112 = vmatpush2.msra.mxu0 0.0
        %1113 = vmatprep.subr.mxu0 0.0
        %1114 = vmatpush2.msra.mxu0 0.0
        %1115 = vmatprep.subr.mxu0 0.0
        %1116 = vmatpush2.msra.mxu0 0.0
        %1117 = vmatprep.subr.mxu0 0.0
        %1118 = vmatpush2.msra.mxu0 0.0
        %1119 = vmatprep.subr.mxu0 0.0
        %1120 = vmatpush2.msra.mxu0 0.0
        %1121 = vmatprep.subr.mxu0 0.0
        %1122 = vmatpush2.msra.mxu0 0.0
        %1123 = vmatprep.subr.mxu0 0.0
        %1124 = vmatpush2.msra.mxu0 0.0
        %1125 = vmatprep.subr.mxu0 0.0
        %1126 = vmatpush2.msra.mxu0 0.0
        %1127 = vmatprep.subr.mxu0 0.0
        %1128 = vmatpush2.msra.mxu0 0.0
        %1129 = vmatprep.subr.mxu0 0.0
        %1130 = vmatpush2.msra.mxu0 0.0
        %1131 = vmatprep.subr.mxu0 0.0
        %1132 = vmatpush2.msra.mxu0 0.0
        %1133 = vmatprep.subr.mxu0 0.0
        %1134 = vmatpush2.msra.mxu0 0.0
        %1135 = vmatprep.subr.mxu0 0.0
        %1136 = vmatpush2.msra.mxu0 0.0
        %1137 = vmatprep.subr.mxu0 0.0
        %1138 = vmatpush2.msra.mxu0 0.0
        %1139 = vmatprep.mubr.f32.mxu0 0.0
        %1140 = vmatmul.mubr.f32.gmra.mxu0 %v849
        %v1141 = vpop.f32.mrf.mxu0
        %v1142 = vadd.f32 0.0, %v1141
        %v1143 = vpop.f32.mrf.mxu0
        %1144 = vdwg.mxu0
        %v1148 = vrot.slane %v1071, 7
        %v1149 = vrot.slane %v1073, 7
        %v1150 = vrot.slane %v1142, 7
        %vm1154 = vcmask 1040384
        %v1155 = vsel %vm1154, %v918, %v1148
        %v1156 = vsel %vm1154, %v920, %v1149
        %v1157 = vsel %vm1154, %v989, %v1150
        %v1158 = vld [vmem:[%s6] sm:$0xff]
        %v1159 = vld [vmem:[%s6 + $0x8] sm:$0xff]
        %v1160 = vld [vmem:[%s6 + $0x10] sm:$0xff]
        %v1161 = vld [vmem:[%s6 + $0x18] sm:$0xff]
        %v1162 = vld [vmem:[%s6 + $0x20] sm:$0xff]
        %v1163 = vld [vmem:[%s6 + $0x28] sm:$0xff]
        %v1164 = vld [vmem:[%s6 + $0x30] sm:$0xff]
        %v1165 = vld [vmem:[%s6 + $0x38] sm:$0xff]
        %v1166 = vld [vmem:[%s6 + $0x40] sm:$0xff]
        %v1167 = vld [vmem:[%s6 + $0x48] sm:$0xff]
        %v1168 = vld [vmem:[%s6 + $0x50] sm:$0xff]
        %v1169 = vld [vmem:[%s6 + $0x58] sm:$0xff]
        %v1170 = vld [vmem:[%s6 + $0x60] sm:$0xff]
        %v1171 = vld [vmem:[%s6 + $0x68] sm:$0xff]
        %v1172 = vld [vmem:[%s6 + $0x70] sm:$0xff]
        %v1173 = vld [vmem:[%s6 + $0x78] sm:$0xff]
        %v1174 = vld [vmem:[%s6 + $0x80] sm:$0xff]
        %v1175 = vld [vmem:[%s6 + $0x88] sm:$0xff]
        %v1176 = vld [vmem:[%s6 + $0x90] sm:$0xff]
        %v1177 = vld [vmem:[%s6 + $0x98] sm:$0xff]
        %v1178 = vld [vmem:[%s6 + $0xa0] sm:$0xff]
        %v1179 = vld [vmem:[%s6 + $0xa8] sm:$0xff]
        %v1180 = vld [vmem:[%s6 + $0xb0] sm:$0xff]
        %v1181 = vld [vmem:[%s6 + $0xb8] sm:$0xff]
        %v1182 = vld [vmem:[%s6 + $0xc0] sm:$0xff]
        %v1183 = vld [vmem:[%s6 + $0xc8] sm:$0xff]
        %v1184 = vld [vmem:[%s6 + $0xd0] sm:$0xff]
        %v1185 = vld [vmem:[%s6 + $0xd8] sm:$0xff]
        %v1186 = vld [vmem:[%s6 + $0xe0] sm:$0xff]
        %v1187 = vld [vmem:[%s6 + $0xe8] sm:$0xff]
        %v1188 = vld [vmem:[%s6 + $0xf0] sm:$0xff]
        %v1189 = vld [vmem:[%s6 + $0xf8] sm:$0xff]
        %v1190 = vld [vmem:[%s6 + $0x100] sm:$0xff]
        %v1191 = vld [vmem:[%s6 + $0x108] sm:$0xff]
        %v1192 = vld [vmem:[%s6 + $0x110] sm:$0xff]
        %v1193 = vld [vmem:[%s6 + $0x118] sm:$0xff]
        %v1195 = vsel %vm847, %v1157, 0
        %1197 = vmatprep.subr.mxu0 0.0
        %1198 = vmatpush1.msra.mxu0 %v1173
        %1199 = vmatprep.subr.mxu0 0.0
        %1200 = vmatpush1.msra.mxu0 %v1172
        %1201 = vmatprep.subr.mxu0 0.0
        %1202 = vmatpush1.msra.mxu0 %v1171
        %1203 = vmatprep.subr.mxu0 0.0
        %1204 = vmatpush1.msra.mxu0 %v1170
        %1205 = vmatprep.subr.mxu0 0.0
        %1206 = vmatpush1.msra.mxu0 %v1169
        %1207 = vmatprep.subr.mxu0 0.0
        %1208 = vmatpush1.msra.mxu0 %v1168
        %1209 = vmatprep.subr.mxu0 0.0
        %1210 = vmatpush1.msra.mxu0 %v1167
        %1211 = vmatprep.subr.mxu0 0.0
        %1212 = vmatpush1.msra.mxu0 %v1166
        %1213 = vmatprep.subr.mxu0 0.0
        %1214 = vmatpush1.msra.mxu0 %v1165
        %1215 = vmatprep.subr.mxu0 0.0
        %1216 = vmatpush1.msra.mxu0 %v1164
        %1217 = vmatprep.subr.mxu0 0.0
        %1218 = vmatpush1.msra.mxu0 %v1163
        %1219 = vmatprep.subr.mxu0 0.0
        %1220 = vmatpush1.msra.mxu0 %v1162
        %1221 = vmatprep.subr.mxu0 0.0
        %1222 = vmatpush1.msra.mxu0 %v1161
        %1223 = vmatprep.subr.mxu0 0.0
        %1224 = vmatpush1.msra.mxu0 %v1160
        %1225 = vmatprep.subr.mxu0 0.0
        %1226 = vmatpush1.msra.mxu0 %v1159
        %1227 = vmatprep.subr.mxu0 0.0
        %1228 = vmatpush1.msra.mxu0 %v1158
        %1229 = vmatprep.subr.mxu0 0.0
        %1230 = vmatpush2.msra.mxu0 %v1189
        %1231 = vmatprep.subr.mxu0 0.0
        %1232 = vmatpush2.msra.mxu0 %v1188
        %1233 = vmatprep.subr.mxu0 0.0
        %1234 = vmatpush2.msra.mxu0 %v1187
        %1235 = vmatprep.subr.mxu0 0.0
        %1236 = vmatpush2.msra.mxu0 %v1186
        %1237 = vmatprep.subr.mxu0 0.0
        %1238 = vmatpush2.msra.mxu0 %v1185
        %1239 = vmatprep.subr.mxu0 0.0
        %1240 = vmatpush2.msra.mxu0 %v1184
        %1241 = vmatprep.subr.mxu0 0.0
        %1242 = vmatpush2.msra.mxu0 %v1183
        %1243 = vmatprep.subr.mxu0 0.0
        %1244 = vmatpush2.msra.mxu0 %v1182
        %1245 = vmatprep.subr.mxu0 0.0
        %1246 = vmatpush2.msra.mxu0 %v1181
        %1247 = vmatprep.subr.mxu0 0.0
        %1248 = vmatpush2.msra.mxu0 %v1180
        %1249 = vmatprep.subr.mxu0 0.0
        %1250 = vmatpush2.msra.mxu0 %v1179
        %1251 = vmatprep.subr.mxu0 0.0
        %1252 = vmatpush2.msra.mxu0 %v1178
        %1253 = vmatprep.subr.mxu0 0.0
        %1254 = vmatpush2.msra.mxu0 %v1177
        %1255 = vmatprep.subr.mxu0 0.0
        %1256 = vmatpush2.msra.mxu0 %v1176
        %1257 = vmatprep.subr.mxu0 0.0
        %1258 = vmatpush2.msra.mxu0 %v1175
        %1259 = vmatprep.subr.mxu0 0.0
        %1260 = vmatpush2.msra.mxu0 %v1174
        %1261 = vmatprep.mubr.f32.mxu0 %v1156
        %1262 = vmatmul.mubr.f32.gmra.mxu0 %v1155
        %v1263 = vpop.f32.mrf.mxu0
        %v1264 = vadd.f32 0.0, %v1263
        %v1265 = vpop.f32.mrf.mxu0
        %1266 = vdwg.mxu0
        %1267 = vmatprep.subr.mxu0 0.0
        %1268 = vmatpush1.msra.mxu0 0.0
        %1269 = vmatprep.subr.mxu0 0.0
        %1270 = vmatpush1.msra.mxu0 0.0
        %1271 = vmatprep.subr.mxu0 0.0
        %1272 = vmatpush1.msra.mxu0 0.0
        %1273 = vmatprep.subr.mxu0 0.0
        %1274 = vmatpush1.msra.mxu0 0.0
        %1275 = vmatprep.subr.mxu0 0.0
        %1276 = vmatpush1.msra.mxu0 0.0
        %1277 = vmatprep.subr.mxu0 0.0
        %1278 = vmatpush1.msra.mxu0 0.0
        %1279 = vmatprep.subr.mxu0 0.0
        %1280 = vmatpush1.msra.mxu0 0.0
        %1281 = vmatprep.subr.mxu0 0.0
        %1282 = vmatpush1.msra.mxu0 0.0
        %1283 = vmatprep.subr.mxu0 0.0
        %1284 = vmatpush1.msra.mxu0 0.0
        %1285 = vmatprep.subr.mxu0 0.0
        %1286 = vmatpush1.msra.mxu0 0.0
        %1287 = vmatprep.subr.mxu0 0.0
        %1288 = vmatpush1.msra.mxu0 0.0
        %1289 = vmatprep.subr.mxu0 0.0
        %1290 = vmatpush1.msra.mxu0 0.0
        %1291 = vmatprep.subr.mxu0 0.0
        %1292 = vmatpush1.msra.mxu0 %v1193
        %1293 = vmatprep.subr.mxu0 0.0
        %1294 = vmatpush1.msra.mxu0 %v1192
        %1295 = vmatprep.subr.mxu0 0.0
        %1296 = vmatpush1.msra.mxu0 %v1191
        %1297 = vmatprep.subr.mxu0 0.0
        %1298 = vmatpush1.msra.mxu0 %v1190
        %1299 = vmatprep.subr.mxu0 0.0
        %1300 = vmatpush2.msra.mxu0 0.0
        %1301 = vmatprep.subr.mxu0 0.0
        %1302 = vmatpush2.msra.mxu0 0.0
        %1303 = vmatprep.subr.mxu0 0.0
        %1304 = vmatpush2.msra.mxu0 0.0
        %1305 = vmatprep.subr.mxu0 0.0
        %1306 = vmatpush2.msra.mxu0 0.0
        %1307 = vmatprep.subr.mxu0 0.0
        %1308 = vmatpush2.msra.mxu0 0.0
        %1309 = vmatprep.subr.mxu0 0.0
        %1310 = vmatpush2.msra.mxu0 0.0
        %1311 = vmatprep.subr.mxu0 0.0
        %1312 = vmatpush2.msra.mxu0 0.0
        %1313 = vmatprep.subr.mxu0 0.0
        %1314 = vmatpush2.msra.mxu0 0.0
        %1315 = vmatprep.subr.mxu0 0.0
        %1316 = vmatpush2.msra.mxu0 0.0
        %1317 = vmatprep.subr.mxu0 0.0
        %1318 = vmatpush2.msra.mxu0 0.0
        %1319 = vmatprep.subr.mxu0 0.0
        %1320 = vmatpush2.msra.mxu0 0.0
        %1321 = vmatprep.subr.mxu0 0.0
        %1322 = vmatpush2.msra.mxu0 0.0
        %1323 = vmatprep.subr.mxu0 0.0
        %1324 = vmatpush2.msra.mxu0 0.0
        %1325 = vmatprep.subr.mxu0 0.0
        %1326 = vmatpush2.msra.mxu0 0.0
        %1327 = vmatprep.subr.mxu0 0.0
        %1328 = vmatpush2.msra.mxu0 0.0
        %1329 = vmatprep.subr.mxu0 0.0
        %1330 = vmatpush2.msra.mxu0 0.0
        %1331 = vmatprep.mubr.f32.mxu0 0.0
        %1332 = vmatmul.mubr.f32.gmra.mxu0 %v1195
        %v1333 = vpop.f32.mrf.mxu0
        %v1334 = vadd.f32 %v1264, %v1333
        %v1335 = vpop.f32.mrf.mxu0
        %1336 = vdwg.mxu0
        %vm1337 = vcmask 58368
        %1338 = vst.msk [vmem:[%s272] sm:$0x3] %vm1337, %v1334
        %s1339 = sand.u32 %s181, 1
        %s1340 = scalar_lea.sflag [#allocation3], %s1339
        %s1341 = sand.u32 %s181, 1
        %s1342 = smul.addr %s1341, 2
        %s1343 = scalar_lea.vmem [#allocation2], %s1342
        // Predicated region
        $region49: #{tpu_custom_call.1} parent=47 // pred_check
          %p1344 = pneg %p191
        $region50: #{tpu_custom_call.1} parent=47 // pred_check_branch
          %1346 = sbr.rel (%p1344) target = $region52
        $region51: #{tpu_custom_call.1} parent=47 // pred_region
          %s1348 = ssub.s32 32, 32
          %1349 = vsyncadd %s1340, %s1348
          %s1350 = smul.addr %s21, 32
          %s1351 = scalar_lea.hbm %s7, %s1350
          %s1353 = sshll.u32 %s1343, 4
          %s1354 = int_to_ptr.vmem [resolvable:$true] %s1353
          %1356 = dma.vmem_to_hbm [thread:$0]  %s1354, 32, %s1351, %s1340
        $region52: #{tpu_custom_call.1} parent=47 // pred_fallthru
          _
      $region48: #{tpu_custom_call.1} parent=5 // pred_fallthru
        _
      %p1357 = scmp.le.s32.totalorder 2, %s16
      // Predicated region
      $region53: #{tpu_custom_call.1} parent=5 // pred_check
        %p1358 = pneg %p1357
      $region54: #{tpu_custom_call.1} parent=5 // pred_check_branch
        %1360 = sbr.rel (%p1358) target = $region56
      $region55: #{tpu_custom_call.1} parent=5 // pred_region
        %s1361 = ssub.s32 %s16, 2
        // Predicated region
        $region57: #{tpu_custom_call.1} parent=55 // pred_check
          %p1362 = pneg %p197
        $region58: #{tpu_custom_call.1} parent=55 // pred_check_branch
          %1364 = sbr.rel (%p1362) target = $region60
        $region59: #{tpu_custom_call.1} parent=55 // pred_region
          %s1365 = sand.u32 %s182, 1
          %s1366 = scalar_lea.sflag [#allocation3], %s1365
          %s1367 = sand.u32 %s182, 1
          %s1368 = smul.addr %s1367, 2
          %s1369 = scalar_lea.vmem [#allocation2], %s1368
          %1370 = dma.done %s1366, 32
        $region60: #{tpu_custom_call.1} parent=55 // pred_fallthru
          _
      $region56: #{tpu_custom_call.1} parent=5 // pred_fallthru
        _
    $region6: #{tpu_custom_call.1} parent=1 // loop_footer
      %s20 = sadd.s32 1, %s16
    $region7: #{tpu_custom_call.1} parent=1 // loop_footer_branch
      %15 = sbr.rel target = $region3
    $region8: #{tpu_custom_call.1} parent=1 // loop_exit
      _
    %1371 = vsyncpa [#allocation3], 1
    %s1372 = scalar_lea.sflag [#allocation3], 1
    %1373 = vsyncpa %s1372, 1

</llo_original>
